<compile_context>
chip_gen: v5e
topology: v5e:2x2
jax: 0.10.0
libtpu: 0.0.40
codegen_flags: <defaults>
</compile_context>

<pallas_src>
import jax
import jax.numpy as jnp
from jax.experimental import pallas as pl
from jax.experimental.pallas import tpu as pltpu


def _round_up(n, m):
    return ((n + m - 1) // m) * m


def resnet_tabular_kernel(x_ref, w1_ref, w2_ref, w3_ref, ws_ref, bias_ref, out_ref):
    # x tile: (TB, input_dim) f32 -> single cast to bf16 for the MXU path.
    x_bf = x_ref[...].astype(jnp.bfloat16)

    b1 = bias_ref[0:1, 0:256]   # (1, 256)
    b2 = bias_ref[1:2, :]       # (1, 512)
    b3 = bias_ref[2:3, :]       # (1, 512)
    bs = bias_ref[3:4, :]       # (1, 512)

    # Shortcut branch: Linear(input_dim, 512)
    shortcut = jnp.dot(x_bf, ws_ref[...], preferred_element_type=jnp.float32) + bs

    # Main branch: fc1 -> ReLU -> fc2 -> ReLU -> fc3
    h = jnp.dot(x_bf, w1_ref[...], preferred_element_type=jnp.float32) + b1
    h = jnp.maximum(h, 0.0)
    h = jnp.dot(h.astype(jnp.bfloat16), w2_ref[...],
                preferred_element_type=jnp.float32) + b2
    h = jnp.maximum(h, 0.0)
    h = jnp.dot(h.astype(jnp.bfloat16), w3_ref[...],
                preferred_element_type=jnp.float32) + b3

    out_ref[...] = (h + shortcut).astype(out_ref.dtype)


def resnet_tabular_forward(x, params, *, block_batch=256):
    """x: [batch, input_dim] float32.
    params: (w1, b1, w2, b2, w3, b3, ws, bs) with weights pre-transposed [in, out]."""
    w1, b1, w2, b2, w3, b3, ws, bs = params
    batch, input_dim = x.shape
    num_classes = w3.shape[1]
    # Residual add in the original module requires fc3 width == shortcut width (512).
    assert num_classes == 512, "ResNetTabular residual add requires num_classes == 512"

    # Batch tile: multiple of 8 sublanes, capped at block_batch; pad batch to a multiple.
    tb = min(_round_up(block_batch, 8), _round_up(batch, 8))
    padded_batch = _round_up(batch, tb)
    if padded_batch != batch:
        x = jnp.pad(x, ((0, padded_batch - batch), (0, 0)))
    grid = (padded_batch // tb,)

    # bf16 weights for the MXU; biases stay f32 and are packed into one operand.
    w1b = w1.astype(jnp.bfloat16)
    w2b = w2.astype(jnp.bfloat16)
    w3b = w3.astype(jnp.bfloat16)
    wsb = ws.astype(jnp.bfloat16)

    bias_pack = jnp.zeros((4, 512), jnp.float32)
    bias_pack = bias_pack.at[0, :256].set(b1.reshape(-1))
    bias_pack = bias_pack.at[1, :].set(b2.reshape(-1))
    bias_pack = bias_pack.at[2, :].set(b3.reshape(-1))
    bias_pack = bias_pack.at[3, :].set(bs.reshape(-1))

    const_map = lambda i: (0, 0)   # weights/biases resident across the batch grid
    in_specs = [
        pl.BlockSpec((tb, input_dim), lambda i: (i, 0)),       # x tile (pipelined)
        pl.BlockSpec((input_dim, 256), const_map),             # W1
        pl.BlockSpec((256, 512), const_map),                   # W2
        pl.BlockSpec((512, num_classes), const_map),           # W3
        pl.BlockSpec((input_dim, 512), const_map),             # Ws (shortcut)
        pl.BlockSpec((4, 512), const_map),                     # packed biases
    ]
    out_spec = pl.BlockSpec((tb, num_classes), lambda i: (i, 0))

    out = pl.pallas_call(
        resnet_tabular_kernel,
        out_shape=jax.ShapeDtypeStruct((padded_batch, num_classes), x.dtype),
        grid=grid,
        in_specs=in_specs,
        out_specs=out_spec,
        compiler_params=pltpu.CompilerParams(
            dimension_semantics=("parallel",),
            vmem_limit_bytes=32 * 1024 * 1024,
        ),
    )(x, w1b, w2b, w3b, wsb, bias_pack)

    return out[:batch]


def init_params(key, input_dim, num_classes):
    """PyTorch nn.Linear-style init (uniform +/- 1/sqrt(fan_in)).
    Weights are stored transposed to [in, out]; biases as [out]."""
    dims = [(input_dim, 256),       # fc1
            (256, 512),             # fc2
            (512, num_classes),     # fc3
            (input_dim, 512)]       # shortcut
    flat = []
    for (fan_in, fan_out) in dims:
        key, kw, kb = jax.random.split(key, 3)
        bound = 1.0 / (fan_in ** 0.5)
        w_t = jax.random.uniform(kw, (fan_in, fan_out), jnp.float32,
                                 minval=-bound, maxval=bound)
        b = jax.random.uniform(kb, (fan_out,), jnp.float32,
                               minval=-bound, maxval=bound)
        flat.append((w_t, b))
    (w1, b1), (w2, b2), (w3, b3), (ws, bs) = flat
    return (w1, b1, w2, b2, w3, b3, ws, bs)


def reference_forward(x, params):
    """Pure-JAX reference mimicking the kernel's numerics
    (bf16 matmul operands, f32 accumulation), matching the PyTorch forward."""
    w1, b1, w2, b2, w3, b3, ws, bs = params

    def dot_bf16(a, w):
        a32 = a.astype(jnp.bfloat16).astype(jnp.float32)
        w32 = w.astype(jnp.bfloat16).astype(jnp.float32)
        return jnp.dot(a32, w32, precision=jax.lax.Precision.HIGHEST,
                       preferred_element_type=jnp.float32)

    shortcut = dot_bf16(x, ws) + bs[None, :]
    h = jnp.maximum(dot_bf16(x, w1) + b1[None, :], 0.0)
    h = jnp.maximum(dot_bf16(h, w2) + b2[None, :], 0.0)
    h = dot_bf16(h, w3) + b3[None, :]
    return h + shortcut


if __name__ == "__main__":
    input_dim = 32
    num_classes = 512   # required by the module's `x + shortcut` residual add
    batch = 64

    key = jax.random.PRNGKey(0)
    key, kx = jax.random.split(key)
    x = jax.random.normal(kx, (batch, input_dim), jnp.float32)

    params = init_params(key, input_dim, num_classes)

    # block_batch=32 -> grid=(2,) so the batch pipeline is exercised even at small shapes.
    out = resnet_tabular_forward(x, params, block_batch=32)
    out = jax.block_until_ready(out)

    ref = reference_forward(x, params)
    assert out.shape == (batch, num_classes)
    assert jnp.allclose(out, ref, atol=5e-3, rtol=5e-3), "mismatch vs JAX reference"

    print("KERNEL_OK")
</pallas_src>

<mosaic_0001>
module attributes {stable_mosaic.version = 11 : i64} {
  func.func @resnet_tabular_kernel(%arg0: i32, %arg1: memref<32x32xf32, #tpu.memory_space<vmem>>, %arg2: memref<32x256xbf16, #tpu.memory_space<vmem>>, %arg3: memref<256x512xbf16, #tpu.memory_space<vmem>>, %arg4: memref<512x512xbf16, #tpu.memory_space<vmem>>, %arg5: memref<32x512xbf16, #tpu.memory_space<vmem>>, %arg6: memref<4x512xf32, #tpu.memory_space<vmem>>, %arg7: memref<32x512xf32, #tpu.memory_space<vmem>>) attributes {dimension_semantics = [#tpu.dimension_semantics<parallel>], iteration_bounds = array<i64: 2>, scalar_prefetch = 0 : i64, scratch_operands = 0 : i64, tpu.core_type = #tpu.core_type<tc>, window_params = [{transform_indices = @transform_0, window_bounds = array<i64: 32, 32>}, {pipeline_mode = #tpu.pipeline_mode<synchronous>, transform_indices = @transform_1, window_bounds = array<i64: 32, 256>}, {pipeline_mode = #tpu.pipeline_mode<synchronous>, transform_indices = @transform_2, window_bounds = array<i64: 256, 512>}, {pipeline_mode = #tpu.pipeline_mode<synchronous>, transform_indices = @transform_3, window_bounds = array<i64: 512, 512>}, {pipeline_mode = #tpu.pipeline_mode<synchronous>, transform_indices = @transform_4, window_bounds = array<i64: 32, 512>}, {pipeline_mode = #tpu.pipeline_mode<synchronous>, transform_indices = @transform_5, window_bounds = array<i64: 4, 512>}, {transform_indices = @transform_6, window_bounds = array<i64: 32, 512>}]} {
    %c0 = arith.constant 0 : index
    %c0_0 = arith.constant 0 : index
    %0 = vector.load %arg1[%c0, %c0_0] : memref<32x32xf32, #tpu.memory_space<vmem>>, vector<32x32xf32>
    %1 = arith.truncf %0 : vector<32x32xf32> to vector<32x32xbf16>
    %c0_1 = arith.constant 0 : index
    %c0_2 = arith.constant 0 : index
    %2 = vector.load %arg6[%c0_1, %c0_2] : memref<4x512xf32, #tpu.memory_space<vmem>>, vector<1x256xf32>
    %c1 = arith.constant 1 : index
    %c0_3 = arith.constant 0 : index
    %3 = vector.load %arg6[%c1, %c0_3] : memref<4x512xf32, #tpu.memory_space<vmem>>, vector<1x512xf32>
    %c2 = arith.constant 2 : index
    %c0_4 = arith.constant 0 : index
    %4 = vector.load %arg6[%c2, %c0_4] : memref<4x512xf32, #tpu.memory_space<vmem>>, vector<1x512xf32>
    %c3 = arith.constant 3 : index
    %c0_5 = arith.constant 0 : index
    %5 = vector.load %arg6[%c3, %c0_5] : memref<4x512xf32, #tpu.memory_space<vmem>>, vector<1x512xf32>
    %c0_6 = arith.constant 0 : index
    %c0_7 = arith.constant 0 : index
    %6 = vector.load %arg5[%c0_6, %c0_7] : memref<32x512xbf16, #tpu.memory_space<vmem>>, vector<32x512xbf16>
    %cst = arith.constant dense<0.000000e+00> : vector<32x512xf32>
    %7 = tpu.matmul %1, %6, %cst {dimension_numbers = #tpu.dot_dimension_numbers<[1], [0], [0], [1], [0, 0, 1, 1], [], []>} : vector<32x32xbf16>, vector<32x512xbf16>, vector<32x512xf32> -> vector<32x512xf32>
    %8 = vector.broadcast %5 : vector<1x512xf32> to vector<32x512xf32>
    %9 = arith.addf %7, %8 : vector<32x512xf32>
    %c0_8 = arith.constant 0 : index
    %c0_9 = arith.constant 0 : index
    %10 = vector.load %arg2[%c0_8, %c0_9] : memref<32x256xbf16, #tpu.memory_space<vmem>>, vector<32x256xbf16>
    %cst_10 = arith.constant dense<0.000000e+00> : vector<32x256xf32>
    %11 = tpu.matmul %1, %10, %cst_10 {dimension_numbers = #tpu.dot_dimension_numbers<[1], [0], [0], [1], [0, 0, 1, 1], [], []>} : vector<32x32xbf16>, vector<32x256xbf16>, vector<32x256xf32> -> vector<32x256xf32>
    %12 = vector.broadcast %2 : vector<1x256xf32> to vector<32x256xf32>
    %13 = arith.addf %11, %12 : vector<32x256xf32>
    %cst_11 = arith.constant 0.000000e+00 : f32
    %14 = vector.broadcast %cst_11 : f32 to vector<32x256xf32>
    %15 = arith.maximumf %13, %14 : vector<32x256xf32>
    %16 = arith.truncf %15 : vector<32x256xf32> to vector<32x256xbf16>
    %c0_12 = arith.constant 0 : index
    %c0_13 = arith.constant 0 : index
    %17 = vector.load %arg3[%c0_12, %c0_13] : memref<256x512xbf16, #tpu.memory_space<vmem>>, vector<256x512xbf16>
    %cst_14 = arith.constant dense<0.000000e+00> : vector<32x512xf32>
    %18 = tpu.matmul %16, %17, %cst_14 {dimension_numbers = #tpu.dot_dimension_numbers<[1], [0], [0], [1], [0, 0, 1, 1], [], []>} : vector<32x256xbf16>, vector<256x512xbf16>, vector<32x512xf32> -> vector<32x512xf32>
    %19 = vector.broadcast %3 : vector<1x512xf32> to vector<32x512xf32>
    %20 = arith.addf %18, %19 : vector<32x512xf32>
    %cst_15 = arith.constant 0.000000e+00 : f32
    %21 = vector.broadcast %cst_15 : f32 to vector<32x512xf32>
    %22 = arith.maximumf %20, %21 : vector<32x512xf32>
    %23 = arith.truncf %22 : vector<32x512xf32> to vector<32x512xbf16>
    %c0_16 = arith.constant 0 : index
    %c0_17 = arith.constant 0 : index
    %24 = vector.load %arg4[%c0_16, %c0_17] : memref<512x512xbf16, #tpu.memory_space<vmem>>, vector<512x512xbf16>
    %cst_18 = arith.constant dense<0.000000e+00> : vector<32x512xf32>
    %25 = tpu.matmul %23, %24, %cst_18 {dimension_numbers = #tpu.dot_dimension_numbers<[1], [0], [0], [1], [0, 0, 1, 1], [], []>} : vector<32x512xbf16>, vector<512x512xbf16>, vector<32x512xf32> -> vector<32x512xf32>
    %26 = vector.broadcast %4 : vector<1x512xf32> to vector<32x512xf32>
    %27 = arith.addf %25, %26 : vector<32x512xf32>
    %28 = arith.addf %27, %9 : vector<32x512xf32>
    %c0_19 = arith.constant 0 : index
    %c0_20 = arith.constant 0 : index
    %29 = vector.load %arg7[%c0_19, %c0_20] : memref<32x512xf32, #tpu.memory_space<vmem>>, vector<32x512xf32>
    tpu.vector_store %arg7[%c0_19, %c0_20], %28 {strides = array<i32>} : memref<32x512xf32, #tpu.memory_space<vmem>>, vector<32x512xf32>,
    return
  }
  func.func @transform_0(%arg0: i32) -> (i32, i32) {
    %c0_i32 = arith.constant 0 : i32
    %c0_i32_0 = arith.constant 0 : i32
    return %arg0, %c0_i32 : i32, i32
  }
  func.func @transform_1(%arg0: i32) -> (i32, i32) {
    %c0_i32 = arith.constant 0 : i32
    %c0_i32_0 = arith.constant 0 : i32
    %c0_i32_1 = arith.constant 0 : i32
    return %c0_i32, %c0_i32_0 : i32, i32
  }
  func.func @transform_2(%arg0: i32) -> (i32, i32) {
    %c0_i32 = arith.constant 0 : i32
    %c0_i32_0 = arith.constant 0 : i32
    %c0_i32_1 = arith.constant 0 : i32
    return %c0_i32, %c0_i32_0 : i32, i32
  }
  func.func @transform_3(%arg0: i32) -> (i32, i32) {
    %c0_i32 = arith.constant 0 : i32
    %c0_i32_0 = arith.constant 0 : i32
    %c0_i32_1 = arith.constant 0 : i32
    return %c0_i32, %c0_i32_0 : i32, i32
  }
  func.func @transform_4(%arg0: i32) -> (i32, i32) {
    %c0_i32 = arith.constant 0 : i32
    %c0_i32_0 = arith.constant 0 : i32
    %c0_i32_1 = arith.constant 0 : i32
    return %c0_i32, %c0_i32_0 : i32, i32
  }
  func.func @transform_5(%arg0: i32) -> (i32, i32) {
    %c0_i32 = arith.constant 0 : i32
    %c0_i32_0 = arith.constant 0 : i32
    %c0_i32_1 = arith.constant 0 : i32
    return %c0_i32, %c0_i32_0 : i32, i32
  }
  func.func @transform_6(%arg0: i32) -> (i32, i32) {
    %c0_i32 = arith.constant 0 : i32
    %c0_i32_0 = arith.constant 0 : i32
    return %arg0, %c0_i32 : i32, i32
  }
}

</mosaic_0001>

<llo_original>
// kernel: tpu_custom_call.1
$region0: #{tpu_custom_call.1}
  #allocation0 [shape = 'u32[]', space=smem, size = 0x4, offset = 0x4, fixed_abs, tag = 'smem constant byte address 0x4 - core index']
  #allocation1 [shape = 'u32[72,128]{1,0:T(1,128)}', space=vmem, size = 0x9000, scoped, tag = 'internal scratch']
  %s0 = inlined_call_operand.vmem [shape: f32[64,32], index: 0, kind: input, shape index: {}]
  %s1 = inlined_call_operand.vmem [shape: bf16[32,256], index: 1, kind: input, shape index: {}]
  %s2 = inlined_call_operand.hbm [shape: bf16[256,512], index: 2, kind: input, shape index: {}]
  %s3 = inlined_call_operand.hbm [shape: bf16[512,512], index: 3, kind: input, shape index: {}]
  %s4 = inlined_call_operand.vmem [shape: bf16[32,512], index: 4, kind: input, shape index: {}]
  %s5 = inlined_call_operand.hbm [shape: f32[4,512], index: 5, kind: input, shape index: {}]
  %s6 = inlined_call_operand.hbm [shape: f32[64,512], index: 6, kind: output, shape index: {}]
  %s7 = sld [smem:[#allocation0]]
  $region69: #{tpu_custom_call.1} parent=0
    _
  %s9 = ssub.s32 1, %s7
  %s10 = scalar_select 0, %s9, %s7
  $region1: #{tpu_custom_call.1} parent=0
    #allocation2 [shape = 'u8[262144]{0}', space=vmem, size = 0x40000, scoped, tag = 'input window, operand 2, single buffered']
    #allocation3 [shape = 's32[2]{0}', space=sflag, size = 0x8, scoped, tag = 'scoped memory for tpu_custom_call.1']
    #allocation4 [shape = 's32[2]{0}', space=sflag, size = 0x8, scoped, tag = 'scoped memory for tpu_custom_call.1']
    #allocation5 [shape = 'u8[524288]{0}', space=vmem, size = 0x80000, scoped, tag = 'input window, operand 3, single buffered']
    #allocation6 [shape = 's32[1]{0}', space=sflag, size = 0x4, scoped, tag = 'scoped memory for tpu_custom_call.1']
    #allocation7 [shape = 'u8[8192]{0}', space=vmem, size = 0x2000, scoped, tag = 'input window, operand 5, single buffered']
    #allocation8 [shape = 'u8[131072]{0}', space=vmem, size = 0x20000, scoped, tag = 'output window, operand 0']
    %11 = vsyncpa [#allocation3], 0
    %12 = vsyncpa [#allocation6], 0
    %13 = vsyncpa [#allocation4], 0
    %s14 = scalar_lea.sflag [#allocation4], 1
    %15 = vsyncpa %s14, 0
    loop: start=0, step=1, limit=4
    $region2: #{tpu_custom_call.1} parent=1 // loop_pre_header
      _
    $region3: #{tpu_custom_call.1} parent=1 // loop_header
      %s17 = sphi 0, %s21
      %p18 = scmp.ge.s32.totalorder %s17, 4
      %s27 = sphi 0, %s29
      %s30 = sphi 0, %s27
      %s31 = sphi 0, %s30
      %s47 = sphi 0, %s31
      %s51 = sphi 0, %s51
      %s53 = sphi 0, %s51
      %s54 = sphi 0, %s53
      %s68 = sphi 0, %s54
      %s72 = sphi 0, %s72
      %s74 = sphi 0, %s72
      %s75 = sphi 0, %s74
      %s89 = sphi 0, %s75
      %s93 = sphi 0, %s93
      %s95 = sphi 0, %s93
      %s96 = sphi 0, %s95
      %s110 = sphi 0, %s96
      %s114 = sphi 0, %s114
      %s116 = sphi 0, %s114
      %s117 = sphi 0, %s116
      %s131 = sphi 0, %s117
      %s135 = sphi 0, %s135
      %s137 = sphi 0, %s135
      %s138 = sphi 0, %s137
      %s152 = sphi 0, %s138
      %s158 = sphi 0, %s160
      %s161 = sphi 0, %s158
      %s162 = sphi 0, %s161
      %s178 = sphi 0, %s162
    $region4: #{tpu_custom_call.1} parent=1 // loop_header_branch
      %20 = sbr.rel (%p18) target = $region8
    $region5: #{tpu_custom_call.1} parent=1 // loop_body
      %s22 = ssub.s32 %s17, 1
      %s23 = ssub.s32 %s17, 2
      %s24 = sadd.s32 %s17, 1
      %s25 = ssub.s32 %s17, %s24
      %p26 = scmp.eq.s32.totalorder %s25, 0
      %s28 = sadd.s32 %s27, 1
      %s29 = scalar_select %p26, %s27, %s28
      %p32 = pneg %p26
      %p33 = scmp.eq.s32.totalorder %s17, 1
      %p34 = por %p32, %p33
      %p35 = scmp.ne.s32.totalorder %s27, %s30
      %p36 = scmp.eq.s32.totalorder %s17, 0
      %p37 = por %p35, %p36
      %p38 = scmp.ne.s32.totalorder %s27, %s30
      %p39 = scmp.eq.s32.totalorder %s22, 1
      %p40 = por %p38, %p39
      %p41 = scmp.ne.s32.totalorder %s30, %s31
      %p42 = scmp.eq.s32.totalorder %s22, 0
      %p43 = por %p41, %p42
      %p44 = scmp.ne.s32.totalorder %s30, %s31
      %p45 = scmp.eq.s32.totalorder %s23, 1
      %p46 = por %p44, %p45
      %p48 = scmp.ne.s32.totalorder %s31, %s47
      %p49 = scmp.eq.s32.totalorder %s23, 0
      %p50 = por %p48, %p49
      %s52 = sadd.s32 %s51, 1
      %p55 = scmp.eq.s32.totalorder %s17, 1
      %p56 = scmp.ne.s32.totalorder %s51, %s53
      %p57 = scmp.eq.s32.totalorder %s17, 0
      %p58 = por %p56, %p57
      %p59 = scmp.ne.s32.totalorder %s51, %s53
      %p60 = scmp.eq.s32.totalorder %s22, 1
      %p61 = por %p59, %p60
      %p62 = scmp.ne.s32.totalorder %s53, %s54
      %p63 = scmp.eq.s32.totalorder %s22, 0
      %p64 = por %p62, %p63
      %p65 = scmp.ne.s32.totalorder %s53, %s54
      %p66 = scmp.eq.s32.totalorder %s23, 1
      %p67 = por %p65, %p66
      %p69 = scmp.ne.s32.totalorder %s54, %s68
      %p70 = scmp.eq.s32.totalorder %s23, 0
      %p71 = por %p69, %p70
      %s73 = sadd.s32 %s72, 1
      %p76 = scmp.eq.s32.totalorder %s17, 1
      %p77 = scmp.ne.s32.totalorder %s72, %s74
      %p78 = scmp.eq.s32.totalorder %s17, 0
      %p79 = por %p77, %p78
      %p80 = scmp.ne.s32.totalorder %s72, %s74
      %p81 = scmp.eq.s32.totalorder %s22, 1
      %p82 = por %p80, %p81
      %p83 = scmp.ne.s32.totalorder %s74, %s75
      %p84 = scmp.eq.s32.totalorder %s22, 0
      %p85 = por %p83, %p84
      %p86 = scmp.ne.s32.totalorder %s74, %s75
      %p87 = scmp.eq.s32.totalorder %s23, 1
      %p88 = por %p86, %p87
      %p90 = scmp.ne.s32.totalorder %s75, %s89
      %p91 = scmp.eq.s32.totalorder %s23, 0
      %p92 = por %p90, %p91
      %s94 = sadd.s32 %s93, 1
      %p97 = scmp.eq.s32.totalorder %s17, 1
      %p98 = scmp.ne.s32.totalorder %s93, %s95
      %p99 = scmp.eq.s32.totalorder %s17, 0
      %p100 = por %p98, %p99
      %p101 = scmp.ne.s32.totalorder %s93, %s95
      %p102 = scmp.eq.s32.totalorder %s22, 1
      %p103 = por %p101, %p102
      %p104 = scmp.ne.s32.totalorder %s95, %s96
      %p105 = scmp.eq.s32.totalorder %s22, 0
      %p106 = por %p104, %p105
      %p107 = scmp.ne.s32.totalorder %s95, %s96
      %p108 = scmp.eq.s32.totalorder %s23, 1
      %p109 = por %p107, %p108
      %p111 = scmp.ne.s32.totalorder %s96, %s110
      %p112 = scmp.eq.s32.totalorder %s23, 0
      %p113 = por %p111, %p112
      %s115 = sadd.s32 %s114, 1
      %p118 = scmp.eq.s32.totalorder %s17, 1
      %p119 = scmp.ne.s32.totalorder %s114, %s116
      %p120 = scmp.eq.s32.totalorder %s17, 0
      %p121 = por %p119, %p120
      %p122 = scmp.ne.s32.totalorder %s114, %s116
      %p123 = scmp.eq.s32.totalorder %s22, 1
      %p124 = por %p122, %p123
      %p125 = scmp.ne.s32.totalorder %s116, %s117
      %p126 = scmp.eq.s32.totalorder %s22, 0
      %p127 = por %p125, %p126
      %p128 = scmp.ne.s32.totalorder %s116, %s117
      %p129 = scmp.eq.s32.totalorder %s23, 1
      %p130 = por %p128, %p129
      %p132 = scmp.ne.s32.totalorder %s117, %s131
      %p133 = scmp.eq.s32.totalorder %s23, 0
      %p134 = por %p132, %p133
      %s136 = sadd.s32 %s135, 1
      %p139 = scmp.eq.s32.totalorder %s17, 1
      %p140 = scmp.ne.s32.totalorder %s135, %s137
      %p141 = scmp.eq.s32.totalorder %s17, 0
      %p142 = por %p140, %p141
      %p143 = scmp.ne.s32.totalorder %s135, %s137
      %p144 = scmp.eq.s32.totalorder %s22, 1
      %p145 = por %p143, %p144
      %p146 = scmp.ne.s32.totalorder %s137, %s138
      %p147 = scmp.eq.s32.totalorder %s22, 0
      %p148 = por %p146, %p147
      %p149 = scmp.ne.s32.totalorder %s137, %s138
      %p150 = scmp.eq.s32.totalorder %s23, 1
      %p151 = por %p149, %p150
      %p153 = scmp.ne.s32.totalorder %s138, %s152
      %p154 = scmp.eq.s32.totalorder %s23, 0
      %p155 = por %p153, %p154
      %s156 = ssub.s32 %s17, %s24
      %p157 = scmp.eq.s32.totalorder %s156, 0
      %s159 = sadd.s32 %s158, 1
      %s160 = scalar_select %p157, %s158, %s159
      %p163 = pneg %p157
      %p164 = scmp.eq.s32.totalorder %s17, 1
      %p165 = por %p163, %p164
      %p166 = scmp.ne.s32.totalorder %s158, %s161
      %p167 = scmp.eq.s32.totalorder %s17, 0
      %p168 = por %p166, %p167
      %p169 = scmp.ne.s32.totalorder %s158, %s161
      %p170 = scmp.eq.s32.totalorder %s22, 1
      %p171 = por %p169, %p170
      %p172 = scmp.ne.s32.totalorder %s161, %s162
      %p173 = scmp.eq.s32.totalorder %s22, 0
      %p174 = por %p172, %p173
      %p175 = scmp.ne.s32.totalorder %s161, %s162
      %p176 = scmp.eq.s32.totalorder %s23, 1
      %p177 = por %p175, %p176
      %p179 = scmp.ne.s32.totalorder %s162, %s178
      %p180 = scmp.eq.s32.totalorder %s23, 0
      %p181 = por %p179, %p180
      %p182 = scmp.le.s32.totalorder 1, %s17
      %p183 = scmp.lt.s32.totalorder %s17, 3
      %p184 = pnand %p182, %p183
      %p185 = pneg %p184
      // Predicated region
      $region9: #{tpu_custom_call.1} parent=5 // pred_check
        _
      $region10: #{tpu_custom_call.1} parent=5 // pred_check_branch
        %187 = sbr.rel (%p184) target = $region12
      $region11: #{tpu_custom_call.1} parent=5 // pred_region
        %s188 = ssub.s32 %s17, 1
        // Predicated region
        $region13: #{tpu_custom_call.1} parent=11 // pred_check
          %p189 = pneg %p64
        $region14: #{tpu_custom_call.1} parent=11 // pred_check_branch
          %191 = sbr.rel (%p189) target = $region16
        $region15: #{tpu_custom_call.1} parent=11 // pred_region
          _
        $region16: #{tpu_custom_call.1} parent=11 // pred_fallthru
          _
        // Predicated region
        $region17: #{tpu_custom_call.1} parent=11 // pred_check
          %p192 = pneg %p85
        $region18: #{tpu_custom_call.1} parent=11 // pred_check_branch
          %194 = sbr.rel (%p192) target = $region20
        $region19: #{tpu_custom_call.1} parent=11 // pred_region
          %196 = vsyncadd [#allocation3], 0
          %s197 = sshll.u32 %s2, 4
          %s198 = int_to_ptr.hbm [resolvable:$true] %s197
          %s199 = sshll.u32 [#allocation2], 4
          %s200 = int_to_ptr.vmem [resolvable:$true] %s199
          %205 = dma.hbm_to_vmem [thread:$0]  %s198, 8192, %s200, [#allocation3], 256, 256, 16
        $region20: #{tpu_custom_call.1} parent=11 // pred_fallthru
          _
        // Predicated region
        $region21: #{tpu_custom_call.1} parent=11 // pred_check
          %p206 = pneg %p106
        $region22: #{tpu_custom_call.1} parent=11 // pred_check_branch
          %208 = sbr.rel (%p206) target = $region24
        $region23: #{tpu_custom_call.1} parent=11 // pred_region
          %210 = vsyncadd [#allocation6], 0
          %s211 = sshll.u32 %s3, 4
          %s212 = int_to_ptr.hbm [resolvable:$true] %s211
          %s213 = sshll.u32 [#allocation5], 4
          %s214 = int_to_ptr.vmem [resolvable:$true] %s213
          %219 = dma.hbm_to_vmem [thread:$0]  %s212, 16384, %s214, [#allocation6], 256, 256, 16
        $region24: #{tpu_custom_call.1} parent=11 // pred_fallthru
          _
        // Predicated region
        $region25: #{tpu_custom_call.1} parent=11 // pred_check
          %p220 = pneg %p127
        $region26: #{tpu_custom_call.1} parent=11 // pred_check_branch
          %222 = sbr.rel (%p220) target = $region28
        $region27: #{tpu_custom_call.1} parent=11 // pred_region
          _
        $region28: #{tpu_custom_call.1} parent=11 // pred_fallthru
          _
        // Predicated region
        $region29: #{tpu_custom_call.1} parent=11 // pred_check
          %p223 = pneg %p148
        $region30: #{tpu_custom_call.1} parent=11 // pred_check_branch
          %225 = sbr.rel (%p223) target = $region32
        $region31: #{tpu_custom_call.1} parent=11 // pred_region
          %227 = vsyncadd [#allocation6], 0
          %s229 = sshll.u32 %s5, 4
          %s230 = int_to_ptr.hbm [resolvable:$true] %s229
          %s231 = sshll.u32 [#allocation7], 4
          %s232 = int_to_ptr.vmem [resolvable:$true] %s231
          %234 = dma.hbm_to_vmem [thread:$0]  %s230, 256, %s232, [#allocation6]
        $region32: #{tpu_custom_call.1} parent=11 // pred_fallthru
          _
      $region12: #{tpu_custom_call.1} parent=5 // pred_fallthru
        _
      %p235 = scmp.lt.s32.totalorder %s17, 2
      // Predicated region
      $region33: #{tpu_custom_call.1} parent=5 // pred_check
        %p236 = pneg %p235
      $region34: #{tpu_custom_call.1} parent=5 // pred_check_branch
        %238 = sbr.rel (%p236) target = $region36
      $region35: #{tpu_custom_call.1} parent=5 // pred_region
        // Predicated region
        $region37: #{tpu_custom_call.1} parent=35 // pred_check
          %p239 = pneg %p37
        $region38: #{tpu_custom_call.1} parent=35 // pred_check_branch
          %241 = sbr.rel (%p239) target = $region40
        $region39: #{tpu_custom_call.1} parent=35 // pred_region
          %s242 = smul.u32 4, %s17
          %p243 = scmp.lt.s32.totalorder %s242, 7
          %s244 = scalar_select %p243, %s242, 7
          %s245 = smul.addr %s244, 8
          %s246 = scalar_lea.vmem %s0, %s245
          %s247 = smul.u32 4, %s17
        $region40: #{tpu_custom_call.1} parent=35 // pred_fallthru
          _
      $region36: #{tpu_custom_call.1} parent=5 // pred_fallthru
        _
      %p248 = scmp.le.s32.totalorder 1, %s17
      %p249 = scmp.lt.s32.totalorder %s17, 3
      %p250 = pnand %p248, %p249
      %p251 = pneg %p250
      // Predicated region
      $region41: #{tpu_custom_call.1} parent=5 // pred_check
        _
      $region42: #{tpu_custom_call.1} parent=5 // pred_check_branch
        %253 = sbr.rel (%p250) target = $region44
      $region43: #{tpu_custom_call.1} parent=5 // pred_region
        %s254 = ssub.s32 %s17, 1
        // Predicated region
        $region45: #{tpu_custom_call.1} parent=43 // pred_check
          %p255 = pneg %p85
        $region46: #{tpu_custom_call.1} parent=43 // pred_check_branch
          %257 = sbr.rel (%p255) target = $region48
        $region47: #{tpu_custom_call.1} parent=43 // pred_region
          %259 = dma.done [#allocation3], 8192
        $region48: #{tpu_custom_call.1} parent=43 // pred_fallthru
          _
        // Predicated region
        $region49: #{tpu_custom_call.1} parent=43 // pred_check
          %p260 = pneg %p106
        $region50: #{tpu_custom_call.1} parent=43 // pred_check_branch
          %262 = sbr.rel (%p260) target = $region52
        $region51: #{tpu_custom_call.1} parent=43 // pred_region
          %264 = dma.done [#allocation6], 16384
        $region52: #{tpu_custom_call.1} parent=43 // pred_fallthru
          _
        // Predicated region
        $region53: #{tpu_custom_call.1} parent=43 // pred_check
          %p265 = pneg %p148
        $region54: #{tpu_custom_call.1} parent=43 // pred_check_branch
          %267 = sbr.rel (%p265) target = $region56
        $region55: #{tpu_custom_call.1} parent=43 // pred_region
          %269 = dma.done [#allocation6], 256
        $region56: #{tpu_custom_call.1} parent=43 // pred_fallthru
          _
        %s270 = smul.u32 4, %s22
        %p271 = scmp.lt.s32.totalorder %s270, 7
        %s272 = scalar_select %p271, %s270, 7
        %s273 = smul.addr %s272, 8
        %s274 = scalar_lea.vmem %s0, %s273
        %p275 = pneg %p43
        %p276 = pneg %p40
        %p277 = pneg %p64
        %p278 = pneg %p61
        %p279 = pneg %p85
        %p280 = pneg %p82
        %p281 = pneg %p106
        %p282 = pneg %p103
        %p283 = pneg %p127
        %p284 = pneg %p124
        %p285 = pneg %p148
        %p286 = pneg %p145
        %p287 = pneg %p174
        %p288 = pneg %p171
        %s289 = sand.u32 %s161, 1
        %s290 = scalar_lea.sflag [#allocation4], %s289
        %s291 = sand.u32 %s161, 1
        %s292 = smul.addr %s291, 128
        %s293 = scalar_lea.vmem [#allocation8], %s292
        %s294 = smul.u32 4, %s22
        %p295 = scmp.lt.s32.totalorder %s294, 7
        %s296 = scalar_select %p295, %s294, 7
        %s297 = smul.addr %s296, 8
        %s298 = scalar_lea.vmem %s0, %s297
        %s299 = smul.u32 4, %s22
        %s300 = smul.u32 4, %s22
        %v302 = vld [vmem:[%s298] sm:$0xff]
        %v303 = vld [vmem:[%s298 + $0x8] sm:$0xff]
        %v304 = vld [vmem:[%s298 + $0x10] sm:$0xff]
        %v305 = vld [vmem:[%s298 + $0x18] sm:$0xff]
        %v306 = vpack.c.bf16 %v303, %v302
        %v307 = vpack.c.bf16 %v305, %v304
        %v308 = vld [vmem:[#allocation7] ss:$4 sm:$0x3]
        %s309 = scalar_lea.vmem [#allocation7], 1
        %v310 = vld [vmem:[%s309] ss:$4 sm:$0xf]
        %s311 = scalar_lea.vmem [#allocation7], 2
        %v312 = vld [vmem:[%s311] ss:$4 sm:$0xf]
        %s313 = scalar_lea.vmem [#allocation7], 3
        %v314 = vld [vmem:[%s313] ss:$4 sm:$0xf]
        %v315 = vld [vmem:[%s4] sm:$0xff]
        %v316 = vld [vmem:[%s4 + $0x8] sm:$0xff]
        %v317 = vld [vmem:[%s4 + $0x10] sm:$0xff]
        %v318 = vld [vmem:[%s4 + $0x18] sm:$0xff]
        %v319 = vld [vmem:[%s4 + $0x20] sm:$0xff]
        %v320 = vld [vmem:[%s4 + $0x28] sm:$0xff]
        %v321 = vld [vmem:[%s4 + $0x30] sm:$0xff]
        %v322 = vld [vmem:[%s4 + $0x38] sm:$0xff]
        %v324 = vperm.slane %v314, 0
        %v325 = vperm.slane %v314, 1
        %v326 = vperm.slane %v314, 2
        %v327 = vperm.slane %v314, 3
        %v340 = vunpack.c.l.b16 %v315
        %v341 = vunpack.c.h.b16 %v315
        %v342 = vunpack.c.l.b16 %v316
        %v343 = vunpack.c.h.b16 %v316
        %v344 = vunpack.c.l.b16 %v317
        %v345 = vunpack.c.h.b16 %v317
        %v346 = vunpack.c.l.b16 %v318
        %v347 = vunpack.c.h.b16 %v318
        %v348 = vunpack.c.l.b16 %v319
        %v349 = vunpack.c.h.b16 %v319
        %v350 = vunpack.c.l.b16 %v320
        %v351 = vunpack.c.h.b16 %v320
        %v352 = vunpack.c.l.b16 %v321
        %v353 = vunpack.c.h.b16 %v321
        %v354 = vunpack.c.l.b16 %v322
        %v355 = vunpack.c.h.b16 %v322
        %v356 = vpack.c.b16 %v344, %v340
        %v357 = vpack.c.b16 %v345, %v341
        %v358 = vpack.c.b16 %v346, %v342
        %v359 = vpack.c.b16 %v347, %v343
        %v360 = vpack.c.b16 %v352, %v348
        %v361 = vpack.c.b16 %v353, %v349
        %v362 = vpack.c.b16 %v354, %v350
        %v363 = vpack.c.b16 %v355, %v351
        %vm372 = vcmask 261120
        %v374 = vsel %vm372, %v306, 0
        %v377 = vsel %vm372, %v307, 0
        %379 = vmatpush.bf16.msra.mxu0 0
        %380 = vmatpush.bf16.msra.mxu0 0
        %381 = vmatpush.bf16.msra.mxu0 0
        %382 = vmatpush.bf16.msra.mxu0 0
        %383 = vmatpush.bf16.msra.mxu0 0
        %384 = vmatpush.bf16.msra.mxu0 0
        %385 = vmatpush.bf16.msra.mxu0 %v360
        %386 = vmatpush.bf16.msra.mxu0 %v356
        %387 = vmatmul.bf16.gmra.mxu0 %v374
        %v388 = vpop.f32.mrf.mxu0
        %v389 = vadd.f32 %v324, %v388
        %v390 = vpop.f32.mrf.mxu0
        %v391 = vadd.f32 %v324, %v390
        %392 = vmatmul.bf16.gmra.mxu0 %v377
        %v393 = vpop.f32.mrf.mxu0
        %v394 = vadd.f32 %v324, %v393
        %v395 = vpop.f32.mrf.mxu0
        %v396 = vadd.f32 %v324, %v395
        %397 = vdwg.mxu0
        %398 = vmatpush.bf16.msra.mxu0 0
        %399 = vmatpush.bf16.msra.mxu0 0
        %400 = vmatpush.bf16.msra.mxu0 0
        %401 = vmatpush.bf16.msra.mxu0 0
        %402 = vmatpush.bf16.msra.mxu0 0
        %403 = vmatpush.bf16.msra.mxu0 0
        %404 = vmatpush.bf16.msra.mxu0 %v361
        %405 = vmatpush.bf16.msra.mxu0 %v357
        %406 = vmatmul.bf16.gmra.mxu0 %v374
        %v407 = vpop.f32.mrf.mxu0
        %v408 = vadd.f32 %v325, %v407
        %v409 = vpop.f32.mrf.mxu0
        %v410 = vadd.f32 %v325, %v409
        %411 = vmatmul.bf16.gmra.mxu0 %v377
        %v412 = vpop.f32.mrf.mxu0
        %v413 = vadd.f32 %v325, %v412
        %v414 = vpop.f32.mrf.mxu0
        %v415 = vadd.f32 %v325, %v414
        %416 = vdwg.mxu0
        %417 = vmatpush.bf16.msra.mxu0 0
        %418 = vmatpush.bf16.msra.mxu0 0
        %419 = vmatpush.bf16.msra.mxu0 0
        %420 = vmatpush.bf16.msra.mxu0 0
        %421 = vmatpush.bf16.msra.mxu0 0
        %422 = vmatpush.bf16.msra.mxu0 0
        %423 = vmatpush.bf16.msra.mxu0 %v362
        %424 = vmatpush.bf16.msra.mxu0 %v358
        %425 = vmatmul.bf16.gmra.mxu0 %v374
        %v426 = vpop.f32.mrf.mxu0
        %v427 = vadd.f32 %v326, %v426
        %v428 = vpop.f32.mrf.mxu0
        %v429 = vadd.f32 %v326, %v428
        %430 = vmatmul.bf16.gmra.mxu0 %v377
        %v431 = vpop.f32.mrf.mxu0
        %v432 = vadd.f32 %v326, %v431
        %v433 = vpop.f32.mrf.mxu0
        %v434 = vadd.f32 %v326, %v433
        %435 = vdwg.mxu0
        %436 = vmatpush.bf16.msra.mxu0 0
        %437 = vmatpush.bf16.msra.mxu0 0
        %438 = vmatpush.bf16.msra.mxu0 0
        %439 = vmatpush.bf16.msra.mxu0 0
        %440 = vmatpush.bf16.msra.mxu0 0
        %441 = vmatpush.bf16.msra.mxu0 0
        %442 = vmatpush.bf16.msra.mxu0 %v363
        %443 = vmatpush.bf16.msra.mxu0 %v359
        %444 = vmatmul.bf16.gmra.mxu0 %v374
        %v445 = vpop.f32.mrf.mxu0
        %v446 = vadd.f32 %v327, %v445
        %v447 = vpop.f32.mrf.mxu0
        %v448 = vadd.f32 %v327, %v447
        %449 = vmatmul.bf16.gmra.mxu0 %v377
        %v450 = vpop.f32.mrf.mxu0
        %v451 = vadd.f32 %v327, %v450
        %v452 = vpop.f32.mrf.mxu0
        %v453 = vadd.f32 %v327, %v452
        %454 = vdwg.mxu0
        %v455 = vld [vmem:[%s1] sm:$0xff]
        %v456 = vld [vmem:[%s1 + $0x8] sm:$0xff]
        %v457 = vld [vmem:[%s1 + $0x10] sm:$0xff]
        %v458 = vld [vmem:[%s1 + $0x18] sm:$0xff]
        %v460 = vperm.slane %v308, 0
        %v461 = vperm.slane %v308, 1
        %v468 = vunpack.c.l.b16 %v455
        %v469 = vunpack.c.h.b16 %v455
        %v470 = vunpack.c.l.b16 %v456
        %v471 = vunpack.c.h.b16 %v456
        %v472 = vunpack.c.l.b16 %v457
        %v473 = vunpack.c.h.b16 %v457
        %v474 = vunpack.c.l.b16 %v458
        %v475 = vunpack.c.h.b16 %v458
        %v476 = vpack.c.b16 %v470, %v468
        %v477 = vpack.c.b16 %v471, %v469
        %v478 = vpack.c.b16 %v474, %v472
        %v479 = vpack.c.b16 %v475, %v473
        %484 = vmatpush.bf16.msra.mxu0 0
        %485 = vmatpush.bf16.msra.mxu0 0
        %486 = vmatpush.bf16.msra.mxu0 0
        %487 = vmatpush.bf16.msra.mxu0 0
        %488 = vmatpush.bf16.msra.mxu0 0
        %489 = vmatpush.bf16.msra.mxu0 0
        %490 = vmatpush.bf16.msra.mxu0 %v478
        %491 = vmatpush.bf16.msra.mxu0 %v476
        %492 = vmatmul.bf16.gmra.mxu0 %v374
        %v493 = vpop.f32.mrf.mxu0
        %v494 = vadd.f32 %v460, %v493
        %v495 = vpop.f32.mrf.mxu0
        %v496 = vadd.f32 %v460, %v495
        %497 = vmatmul.bf16.gmra.mxu0 %v377
        %v498 = vpop.f32.mrf.mxu0
        %v499 = vadd.f32 %v460, %v498
        %v500 = vpop.f32.mrf.mxu0
        %v501 = vadd.f32 %v460, %v500
        %502 = vdwg.mxu0
        %503 = vmatpush.bf16.msra.mxu0 0
        %504 = vmatpush.bf16.msra.mxu0 0
        %505 = vmatpush.bf16.msra.mxu0 0
        %506 = vmatpush.bf16.msra.mxu0 0
        %507 = vmatpush.bf16.msra.mxu0 0
        %508 = vmatpush.bf16.msra.mxu0 0
        %509 = vmatpush.bf16.msra.mxu0 %v479
        %510 = vmatpush.bf16.msra.mxu0 %v477
        %511 = vmatmul.bf16.gmra.mxu0 %v374
        %v512 = vpop.f32.mrf.mxu0
        %v513 = vadd.f32 %v461, %v512
        %v514 = vpop.f32.mrf.mxu0
        %v515 = vadd.f32 %v461, %v514
        %516 = vmatmul.bf16.gmra.mxu0 %v377
        %v517 = vpop.f32.mrf.mxu0
        %v518 = vadd.f32 %v461, %v517
        %v519 = vpop.f32.mrf.mxu0
        %v520 = vadd.f32 %v461, %v519
        %521 = vdwg.mxu0
        %v522 = vmax.f32 %v494, 0.0
        %v523 = vmax.f32 %v513, 0.0
        %v524 = vmax.f32 %v496, 0.0
        %v525 = vmax.f32 %v515, 0.0
        %v526 = vmax.f32 %v499, 0.0
        %v527 = vmax.f32 %v518, 0.0
        %v528 = vmax.f32 %v501, 0.0
        %v529 = vmax.f32 %v520, 0.0
        %v530 = vpack.c.bf16 %v524, %v522
        %v531 = vpack.c.bf16 %v525, %v523
        %v532 = vpack.c.bf16 %v528, %v526
        %v533 = vpack.c.bf16 %v529, %v527
        %v534 = vld [vmem:[#allocation2] sm:$0xff]
        %v535 = vld [vmem:[#allocation2 + $0x8] sm:$0xff]
        %v536 = vld [vmem:[#allocation2 + $0x10] sm:$0xff]
        %v537 = vld [vmem:[#allocation2 + $0x18] sm:$0xff]
        %v538 = vld [vmem:[#allocation2 + $0x20] sm:$0xff]
        %v539 = vld [vmem:[#allocation2 + $0x28] sm:$0xff]
        %v540 = vld [vmem:[#allocation2 + $0x30] sm:$0xff]
        %v541 = vld [vmem:[#allocation2 + $0x38] sm:$0xff]
        %v542 = vld [vmem:[#allocation2 + $0x40] sm:$0xff]
        %v543 = vld [vmem:[#allocation2 + $0x48] sm:$0xff]
        %v544 = vld [vmem:[#allocation2 + $0x50] sm:$0xff]
        %v545 = vld [vmem:[#allocation2 + $0x58] sm:$0xff]
        %v546 = vld [vmem:[#allocation2 + $0x60] sm:$0xff]
        %v547 = vld [vmem:[#allocation2 + $0x68] sm:$0xff]
        %v548 = vld [vmem:[#allocation2 + $0x70] sm:$0xff]
        %v549 = vld [vmem:[#allocation2 + $0x78] sm:$0xff]
        %v550 = vld [vmem:[#allocation2 + $0x80] sm:$0xff]
        %v551 = vld [vmem:[#allocation2 + $0x88] sm:$0xff]
        %v552 = vld [vmem:[#allocation2 + $0x90] sm:$0xff]
        %v553 = vld [vmem:[#allocation2 + $0x98] sm:$0xff]
        %v554 = vld [vmem:[#allocation2 + $0xa0] sm:$0xff]
        %v555 = vld [vmem:[#allocation2 + $0xa8] sm:$0xff]
        %v556 = vld [vmem:[#allocation2 + $0xb0] sm:$0xff]
        %v557 = vld [vmem:[#allocation2 + $0xb8] sm:$0xff]
        %v558 = vld [vmem:[#allocation2 + $0xc0] sm:$0xff]
        %v559 = vld [vmem:[#allocation2 + $0xc8] sm:$0xff]
        %v560 = vld [vmem:[#allocation2 + $0xd0] sm:$0xff]
        %v561 = vld [vmem:[#allocation2 + $0xd8] sm:$0xff]
        %v562 = vld [vmem:[#allocation2 + $0xe0] sm:$0xff]
        %v563 = vld [vmem:[#allocation2 + $0xe8] sm:$0xff]
        %v564 = vld [vmem:[#allocation2 + $0xf0] sm:$0xff]
        %v565 = vld [vmem:[#allocation2 + $0xf8] sm:$0xff]
        %v566 = vld [vmem:[#allocation2 + $0x100] sm:$0xff]
        %v567 = vld [vmem:[#allocation2 + $0x108] sm:$0xff]
        %v568 = vld [vmem:[#allocation2 + $0x110] sm:$0xff]
        %v569 = vld [vmem:[#allocation2 + $0x118] sm:$0xff]
        %v570 = vld [vmem:[#allocation2 + $0x120] sm:$0xff]
        %v571 = vld [vmem:[#allocation2 + $0x128] sm:$0xff]
        %v572 = vld [vmem:[#allocation2 + $0x130] sm:$0xff]
        %v573 = vld [vmem:[#allocation2 + $0x138] sm:$0xff]
        %v574 = vld [vmem:[#allocation2 + $0x140] sm:$0xff]
        %v575 = vld [vmem:[#allocation2 + $0x148] sm:$0xff]
        %v576 = vld [vmem:[#allocation2 + $0x150] sm:$0xff]
        %v577 = vld [vmem:[#allocation2 + $0x158] sm:$0xff]
        %v578 = vld [vmem:[#allocation2 + $0x160] sm:$0xff]
        %v579 = vld [vmem:[#allocation2 + $0x168] sm:$0xff]
        %v580 = vld [vmem:[#allocation2 + $0x170] sm:$0xff]
        %v581 = vld [vmem:[#allocation2 + $0x178] sm:$0xff]
        %v582 = vld [vmem:[#allocation2 + $0x180] sm:$0xff]
        %v583 = vld [vmem:[#allocation2 + $0x188] sm:$0xff]
        %v584 = vld [vmem:[#allocation2 + $0x190] sm:$0xff]
        %v585 = vld [vmem:[#allocation2 + $0x198] sm:$0xff]
        %v586 = vld [vmem:[#allocation2 + $0x1a0] sm:$0xff]
        %v587 = vld [vmem:[#allocation2 + $0x1a8] sm:$0xff]
        %v588 = vld [vmem:[#allocation2 + $0x1b0] sm:$0xff]
        %v589 = vld [vmem:[#allocation2 + $0x1b8] sm:$0xff]
        %v590 = vld [vmem:[#allocation2 + $0x1c0] sm:$0xff]
        %v591 = vld [vmem:[#allocation2 + $0x1c8] sm:$0xff]
        %v592 = vld [vmem:[#allocation2 + $0x1d0] sm:$0xff]
        %v593 = vld [vmem:[#allocation2 + $0x1d8] sm:$0xff]
        %v594 = vld [vmem:[#allocation2 + $0x1e0] sm:$0xff]
        %v595 = vld [vmem:[#allocation2 + $0x1e8] sm:$0xff]
        %v596 = vld [vmem:[#allocation2 + $0x1f0] sm:$0xff]
        %v597 = vld [vmem:[#allocation2 + $0x1f8] sm:$0xff]
        %v599 = vperm.slane %v310, 0
        %v600 = vperm.slane %v310, 1
        %v601 = vperm.slane %v310, 2
        %v602 = vperm.slane %v310, 3
        %v671 = vunpack.c.l.b16 %v534
        %v672 = vunpack.c.h.b16 %v534
        %v673 = vunpack.c.l.b16 %v535
        %v674 = vunpack.c.h.b16 %v535
        %v675 = vunpack.c.l.b16 %v536
        %v676 = vunpack.c.h.b16 %v536
        %v677 = vunpack.c.l.b16 %v537
        %v678 = vunpack.c.h.b16 %v537
        %v679 = vunpack.c.l.b16 %v538
        %v680 = vunpack.c.h.b16 %v538
        %v681 = vunpack.c.l.b16 %v539
        %v682 = vunpack.c.h.b16 %v539
        %v683 = vunpack.c.l.b16 %v540
        %v684 = vunpack.c.h.b16 %v540
        %v685 = vunpack.c.l.b16 %v541
        %v686 = vunpack.c.h.b16 %v541
        %v687 = vunpack.c.l.b16 %v542
        %v688 = vunpack.c.h.b16 %v542
        %v689 = vunpack.c.l.b16 %v543
        %v690 = vunpack.c.h.b16 %v543
        %v691 = vunpack.c.l.b16 %v544
        %v692 = vunpack.c.h.b16 %v544
        %v693 = vunpack.c.l.b16 %v545
        %v694 = vunpack.c.h.b16 %v545
        %v695 = vunpack.c.l.b16 %v546
        %v696 = vunpack.c.h.b16 %v546
        %v697 = vunpack.c.l.b16 %v547
        %v698 = vunpack.c.h.b16 %v547
        %v699 = vunpack.c.l.b16 %v548
        %v700 = vunpack.c.h.b16 %v548
        %v701 = vunpack.c.l.b16 %v549
        %v702 = vunpack.c.h.b16 %v549
        %v703 = vunpack.c.l.b16 %v550
        %v704 = vunpack.c.h.b16 %v550
        %v705 = vunpack.c.l.b16 %v551
        %v706 = vunpack.c.h.b16 %v551
        %v707 = vunpack.c.l.b16 %v552
        %v708 = vunpack.c.h.b16 %v552
        %v709 = vunpack.c.l.b16 %v553
        %v710 = vunpack.c.h.b16 %v553
        %v711 = vunpack.c.l.b16 %v554
        %v712 = vunpack.c.h.b16 %v554
        %v713 = vunpack.c.l.b16 %v555
        %v714 = vunpack.c.h.b16 %v555
        %v715 = vunpack.c.l.b16 %v556
        %v716 = vunpack.c.h.b16 %v556
        %v717 = vunpack.c.l.b16 %v557
        %v718 = vunpack.c.h.b16 %v557
        %v719 = vunpack.c.l.b16 %v558
        %v720 = vunpack.c.h.b16 %v558
        %v721 = vunpack.c.l.b16 %v559
        %v722 = vunpack.c.h.b16 %v559
        %v723 = vunpack.c.l.b16 %v560
        %v724 = vunpack.c.h.b16 %v560
        %v725 = vunpack.c.l.b16 %v561
        %v726 = vunpack.c.h.b16 %v561
        %v727 = vunpack.c.l.b16 %v562
        %v728 = vunpack.c.h.b16 %v562
        %v729 = vunpack.c.l.b16 %v563
        %v730 = vunpack.c.h.b16 %v563
        %v731 = vunpack.c.l.b16 %v564
        %v732 = vunpack.c.h.b16 %v564
        %v733 = vunpack.c.l.b16 %v565
        %v734 = vunpack.c.h.b16 %v565
        %v735 = vunpack.c.l.b16 %v566
        %v736 = vunpack.c.h.b16 %v566
        %v737 = vunpack.c.l.b16 %v567
        %v738 = vunpack.c.h.b16 %v567
        %v739 = vunpack.c.l.b16 %v568
        %v740 = vunpack.c.h.b16 %v568
        %v741 = vunpack.c.l.b16 %v569
        %v742 = vunpack.c.h.b16 %v569
        %v743 = vunpack.c.l.b16 %v570
        %v744 = vunpack.c.h.b16 %v570
        %v745 = vunpack.c.l.b16 %v571
        %v746 = vunpack.c.h.b16 %v571
        %v747 = vunpack.c.l.b16 %v572
        %v748 = vunpack.c.h.b16 %v572
        %v749 = vunpack.c.l.b16 %v573
        %v750 = vunpack.c.h.b16 %v573
        %v751 = vunpack.c.l.b16 %v574
        %v752 = vunpack.c.h.b16 %v574
        %v753 = vunpack.c.l.b16 %v575
        %v754 = vunpack.c.h.b16 %v575
        %v755 = vunpack.c.l.b16 %v576
        %v756 = vunpack.c.h.b16 %v576
        %v757 = vunpack.c.l.b16 %v577
        %v758 = vunpack.c.h.b16 %v577
        %v759 = vunpack.c.l.b16 %v578
        %v760 = vunpack.c.h.b16 %v578
        %v761 = vunpack.c.l.b16 %v579
        %v762 = vunpack.c.h.b16 %v579
        %v763 = vunpack.c.l.b16 %v580
        %v764 = vunpack.c.h.b16 %v580
        %v765 = vunpack.c.l.b16 %v581
        %v766 = vunpack.c.h.b16 %v581
        %v767 = vunpack.c.l.b16 %v582
        %v768 = vunpack.c.h.b16 %v582
        %v769 = vunpack.c.l.b16 %v583
        %v770 = vunpack.c.h.b16 %v583
        %v771 = vunpack.c.l.b16 %v584
        %v772 = vunpack.c.h.b16 %v584
        %v773 = vunpack.c.l.b16 %v585
        %v774 = vunpack.c.h.b16 %v585
        %v775 = vunpack.c.l.b16 %v586
        %v776 = vunpack.c.h.b16 %v586
        %v777 = vunpack.c.l.b16 %v587
        %v778 = vunpack.c.h.b16 %v587
        %v779 = vunpack.c.l.b16 %v588
        %v780 = vunpack.c.h.b16 %v588
        %v781 = vunpack.c.l.b16 %v589
        %v782 = vunpack.c.h.b16 %v589
        %v783 = vunpack.c.l.b16 %v590
        %v784 = vunpack.c.h.b16 %v590
        %v785 = vunpack.c.l.b16 %v591
        %v786 = vunpack.c.h.b16 %v591
        %v787 = vunpack.c.l.b16 %v592
        %v788 = vunpack.c.h.b16 %v592
        %v789 = vunpack.c.l.b16 %v593
        %v790 = vunpack.c.h.b16 %v593
        %v791 = vunpack.c.l.b16 %v594
        %v792 = vunpack.c.h.b16 %v594
        %v793 = vunpack.c.l.b16 %v595
        %v794 = vunpack.c.h.b16 %v595
        %v795 = vunpack.c.l.b16 %v596
        %v796 = vunpack.c.h.b16 %v596
        %v797 = vunpack.c.l.b16 %v597
        %v798 = vunpack.c.h.b16 %v597
        %v799 = vpack.c.b16 %v675, %v671
        %v800 = vpack.c.b16 %v676, %v672
        %v801 = vpack.c.b16 %v677, %v673
        %v802 = vpack.c.b16 %v678, %v674
        %v803 = vpack.c.b16 %v683, %v679
        %v804 = vpack.c.b16 %v684, %v680
        %v805 = vpack.c.b16 %v685, %v681
        %v806 = vpack.c.b16 %v686, %v682
        %v807 = vpack.c.b16 %v691, %v687
        %v808 = vpack.c.b16 %v692, %v688
        %v809 = vpack.c.b16 %v693, %v689
        %v810 = vpack.c.b16 %v694, %v690
        %v811 = vpack.c.b16 %v699, %v695
        %v812 = vpack.c.b16 %v700, %v696
        %v813 = vpack.c.b16 %v701, %v697
        %v814 = vpack.c.b16 %v702, %v698
        %v815 = vpack.c.b16 %v707, %v703
        %v816 = vpack.c.b16 %v708, %v704
        %v817 = vpack.c.b16 %v709, %v705
        %v818 = vpack.c.b16 %v710, %v706
        %v819 = vpack.c.b16 %v715, %v711
        %v820 = vpack.c.b16 %v716, %v712
        %v821 = vpack.c.b16 %v717, %v713
        %v822 = vpack.c.b16 %v718, %v714
        %v823 = vpack.c.b16 %v723, %v719
        %v824 = vpack.c.b16 %v724, %v720
        %v825 = vpack.c.b16 %v725, %v721
        %v826 = vpack.c.b16 %v726, %v722
        %v827 = vpack.c.b16 %v731, %v727
        %v828 = vpack.c.b16 %v732, %v728
        %v829 = vpack.c.b16 %v733, %v729
        %v830 = vpack.c.b16 %v734, %v730
        %v831 = vpack.c.b16 %v739, %v735
        %v832 = vpack.c.b16 %v740, %v736
        %v833 = vpack.c.b16 %v741, %v737
        %v834 = vpack.c.b16 %v742, %v738
        %v835 = vpack.c.b16 %v747, %v743
        %v836 = vpack.c.b16 %v748, %v744
        %v837 = vpack.c.b16 %v749, %v745
        %v838 = vpack.c.b16 %v750, %v746
        %v839 = vpack.c.b16 %v755, %v751
        %v840 = vpack.c.b16 %v756, %v752
        %v841 = vpack.c.b16 %v757, %v753
        %v842 = vpack.c.b16 %v758, %v754
        %v843 = vpack.c.b16 %v763, %v759
        %v844 = vpack.c.b16 %v764, %v760
        %v845 = vpack.c.b16 %v765, %v761
        %v846 = vpack.c.b16 %v766, %v762
        %v847 = vpack.c.b16 %v771, %v767
        %v848 = vpack.c.b16 %v772, %v768
        %v849 = vpack.c.b16 %v773, %v769
        %v850 = vpack.c.b16 %v774, %v770
        %v851 = vpack.c.b16 %v779, %v775
        %v852 = vpack.c.b16 %v780, %v776
        %v853 = vpack.c.b16 %v781, %v777
        %v854 = vpack.c.b16 %v782, %v778
        %v855 = vpack.c.b16 %v787, %v783
        %v856 = vpack.c.b16 %v788, %v784
        %v857 = vpack.c.b16 %v789, %v785
        %v858 = vpack.c.b16 %v790, %v786
        %v859 = vpack.c.b16 %v795, %v791
        %v860 = vpack.c.b16 %v796, %v792
        %v861 = vpack.c.b16 %v797, %v793
        %v862 = vpack.c.b16 %v798, %v794
        %927 = vmatpush.bf16.msra.mxu0 %v827
        %928 = vmatpush.bf16.msra.mxu0 %v823
        %929 = vmatpush.bf16.msra.mxu0 %v819
        %930 = vmatpush.bf16.msra.mxu0 %v815
        %931 = vmatpush.bf16.msra.mxu0 %v811
        %932 = vmatpush.bf16.msra.mxu0 %v807
        %933 = vmatpush.bf16.msra.mxu0 %v803
        %934 = vmatpush.bf16.msra.mxu0 %v799
        %935 = vmatmul.bf16.gmra.mxu0 %v530
        %v936 = vpop.f32.mrf.mxu0
        %v937 = vadd.f32 %v599, %v936
        %v938 = vpop.f32.mrf.mxu0
        %v939 = vadd.f32 %v599, %v938
        %940 = vmatmul.bf16.gmra.mxu0 %v532
        %v941 = vpop.f32.mrf.mxu0
        %v942 = vadd.f32 %v599, %v941
        %v943 = vpop.f32.mrf.mxu0
        %v944 = vadd.f32 %v599, %v943
        %945 = vdwg.mxu0
        %946 = vmatpush.bf16.msra.mxu0 %v859
        %947 = vmatpush.bf16.msra.mxu0 %v855
        %948 = vmatpush.bf16.msra.mxu0 %v851
        %949 = vmatpush.bf16.msra.mxu0 %v847
        %950 = vmatpush.bf16.msra.mxu0 %v843
        %951 = vmatpush.bf16.msra.mxu0 %v839
        %952 = vmatpush.bf16.msra.mxu0 %v835
        %953 = vmatpush.bf16.msra.mxu0 %v831
        %954 = vmatmul.bf16.gmra.mxu0 %v531
        %v955 = vpop.f32.mrf.mxu0
        %v956 = vadd.f32 %v937, %v955
        %v957 = vpop.f32.mrf.mxu0
        %v958 = vadd.f32 %v939, %v957
        %959 = vmatmul.bf16.gmra.mxu0 %v533
        %v960 = vpop.f32.mrf.mxu0
        %v961 = vadd.f32 %v942, %v960
        %v962 = vpop.f32.mrf.mxu0
        %v963 = vadd.f32 %v944, %v962
        %964 = vdwg.mxu0
        %965 = vmatpush.bf16.msra.mxu0 %v828
        %966 = vmatpush.bf16.msra.mxu0 %v824
        %967 = vmatpush.bf16.msra.mxu0 %v820
        %968 = vmatpush.bf16.msra.mxu0 %v816
        %969 = vmatpush.bf16.msra.mxu0 %v812
        %970 = vmatpush.bf16.msra.mxu0 %v808
        %971 = vmatpush.bf16.msra.mxu0 %v804
        %972 = vmatpush.bf16.msra.mxu0 %v800
        %973 = vmatmul.bf16.gmra.mxu0 %v530
        %v974 = vpop.f32.mrf.mxu0
        %v975 = vadd.f32 %v600, %v974
        %v976 = vpop.f32.mrf.mxu0
        %v977 = vadd.f32 %v600, %v976
        %978 = vmatmul.bf16.gmra.mxu0 %v532
        %v979 = vpop.f32.mrf.mxu0
        %v980 = vadd.f32 %v600, %v979
        %v981 = vpop.f32.mrf.mxu0
        %v982 = vadd.f32 %v600, %v981
        %983 = vdwg.mxu0
        %984 = vmatpush.bf16.msra.mxu0 %v860
        %985 = vmatpush.bf16.msra.mxu0 %v856
        %986 = vmatpush.bf16.msra.mxu0 %v852
        %987 = vmatpush.bf16.msra.mxu0 %v848
        %988 = vmatpush.bf16.msra.mxu0 %v844
        %989 = vmatpush.bf16.msra.mxu0 %v840
        %990 = vmatpush.bf16.msra.mxu0 %v836
        %991 = vmatpush.bf16.msra.mxu0 %v832
        %992 = vmatmul.bf16.gmra.mxu0 %v531
        %v993 = vpop.f32.mrf.mxu0
        %v994 = vadd.f32 %v975, %v993
        %v995 = vpop.f32.mrf.mxu0
        %v996 = vadd.f32 %v977, %v995
        %997 = vmatmul.bf16.gmra.mxu0 %v533
        %v998 = vpop.f32.mrf.mxu0
        %v999 = vadd.f32 %v980, %v998
        %v1000 = vpop.f32.mrf.mxu0
        %v1001 = vadd.f32 %v982, %v1000
        %1002 = vdwg.mxu0
        %1003 = vmatpush.bf16.msra.mxu0 %v829
        %1004 = vmatpush.bf16.msra.mxu0 %v825
        %1005 = vmatpush.bf16.msra.mxu0 %v821
        %1006 = vmatpush.bf16.msra.mxu0 %v817
        %1007 = vmatpush.bf16.msra.mxu0 %v813
        %1008 = vmatpush.bf16.msra.mxu0 %v809
        %1009 = vmatpush.bf16.msra.mxu0 %v805
        %1010 = vmatpush.bf16.msra.mxu0 %v801
        %1011 = vmatmul.bf16.gmra.mxu0 %v530
        %v1012 = vpop.f32.mrf.mxu0
        %v1013 = vadd.f32 %v601, %v1012
        %v1014 = vpop.f32.mrf.mxu0
        %v1015 = vadd.f32 %v601, %v1014
        %1016 = vmatmul.bf16.gmra.mxu0 %v532
        %v1017 = vpop.f32.mrf.mxu0
        %v1018 = vadd.f32 %v601, %v1017
        %v1019 = vpop.f32.mrf.mxu0
        %v1020 = vadd.f32 %v601, %v1019
        %1021 = vdwg.mxu0
        %1022 = vmatpush.bf16.msra.mxu0 %v861
        %1023 = vmatpush.bf16.msra.mxu0 %v857
        %1024 = vmatpush.bf16.msra.mxu0 %v853
        %1025 = vmatpush.bf16.msra.mxu0 %v849
        %1026 = vmatpush.bf16.msra.mxu0 %v845
        %1027 = vmatpush.bf16.msra.mxu0 %v841
        %1028 = vmatpush.bf16.msra.mxu0 %v837
        %1029 = vmatpush.bf16.msra.mxu0 %v833
        %1030 = vmatmul.bf16.gmra.mxu0 %v531
        %v1031 = vpop.f32.mrf.mxu0
        %v1032 = vadd.f32 %v1013, %v1031
        %v1033 = vpop.f32.mrf.mxu0
        %v1034 = vadd.f32 %v1015, %v1033
        %1035 = vmatmul.bf16.gmra.mxu0 %v533
        %v1036 = vpop.f32.mrf.mxu0
        %v1037 = vadd.f32 %v1018, %v1036
        %v1038 = vpop.f32.mrf.mxu0
        %v1039 = vadd.f32 %v1020, %v1038
        %1040 = vdwg.mxu0
        %1041 = vmatpush.bf16.msra.mxu0 %v830
        %1042 = vmatpush.bf16.msra.mxu0 %v826
        %1043 = vmatpush.bf16.msra.mxu0 %v822
        %1044 = vmatpush.bf16.msra.mxu0 %v818
        %1045 = vmatpush.bf16.msra.mxu0 %v814
        %1046 = vmatpush.bf16.msra.mxu0 %v810
        %1047 = vmatpush.bf16.msra.mxu0 %v806
        %1048 = vmatpush.bf16.msra.mxu0 %v802
        %1049 = vmatmul.bf16.gmra.mxu0 %v530
        %v1050 = vpop.f32.mrf.mxu0
        %v1051 = vadd.f32 %v602, %v1050
        %v1052 = vpop.f32.mrf.mxu0
        %v1053 = vadd.f32 %v602, %v1052
        %1054 = vmatmul.bf16.gmra.mxu0 %v532
        %v1055 = vpop.f32.mrf.mxu0
        %v1056 = vadd.f32 %v602, %v1055
        %v1057 = vpop.f32.mrf.mxu0
        %v1058 = vadd.f32 %v602, %v1057
        %1059 = vdwg.mxu0
        %1060 = vmatpush.bf16.msra.mxu0 %v862
        %1061 = vmatpush.bf16.msra.mxu0 %v858
        %1062 = vmatpush.bf16.msra.mxu0 %v854
        %1063 = vmatpush.bf16.msra.mxu0 %v850
        %1064 = vmatpush.bf16.msra.mxu0 %v846
        %1065 = vmatpush.bf16.msra.mxu0 %v842
        %1066 = vmatpush.bf16.msra.mxu0 %v838
        %1067 = vmatpush.bf16.msra.mxu0 %v834
        %1068 = vmatmul.bf16.gmra.mxu0 %v531
        %v1069 = vpop.f32.mrf.mxu0
        %v1070 = vadd.f32 %v1051, %v1069
        %v1071 = vpop.f32.mrf.mxu0
        %v1072 = vadd.f32 %v1053, %v1071
        %1073 = vmatmul.bf16.gmra.mxu0 %v533
        %v1074 = vpop.f32.mrf.mxu0
        %v1075 = vadd.f32 %v1056, %v1074
        %v1076 = vpop.f32.mrf.mxu0
        %v1077 = vadd.f32 %v1058, %v1076
        %1078 = vdwg.mxu0
        %v1079 = vmax.f32 %v956, 0.0
        %v1080 = vmax.f32 %v994, 0.0
        %v1081 = vmax.f32 %v1032, 0.0
        %v1082 = vmax.f32 %v1070, 0.0
        %v1083 = vmax.f32 %v958, 0.0
        %v1084 = vmax.f32 %v996, 0.0
        %v1085 = vmax.f32 %v1034, 0.0
        %v1086 = vmax.f32 %v1072, 0.0
        %v1087 = vmax.f32 %v961, 0.0
        %v1088 = vmax.f32 %v999, 0.0
        %v1089 = vmax.f32 %v1037, 0.0
        %v1090 = vmax.f32 %v1075, 0.0
        %v1091 = vmax.f32 %v963, 0.0
        %v1092 = vmax.f32 %v1001, 0.0
        %v1093 = vmax.f32 %v1039, 0.0
        %v1094 = vmax.f32 %v1077, 0.0
        %v1095 = vpack.c.bf16 %v1083, %v1079
        %v1096 = vpack.c.bf16 %v1084, %v1080
        %v1097 = vpack.c.bf16 %v1085, %v1081
        %v1098 = vpack.c.bf16 %v1086, %v1082
        %v1099 = vpack.c.bf16 %v1091, %v1087
        %v1100 = vpack.c.bf16 %v1092, %v1088
        %v1101 = vpack.c.bf16 %v1093, %v1089
        %v1102 = vpack.c.bf16 %v1094, %v1090
        %v1103 = vld [vmem:[#allocation5] sm:$0xff]
        %v1104 = vld [vmem:[#allocation5 + $0x8] sm:$0xff]
        %v1105 = vld [vmem:[#allocation5 + $0x10] sm:$0xff]
        %v1106 = vld [vmem:[#allocation5 + $0x18] sm:$0xff]
        %v1107 = vld [vmem:[#allocation5 + $0x20] sm:$0xff]
        %v1108 = vld [vmem:[#allocation5 + $0x28] sm:$0xff]
        %v1109 = vld [vmem:[#allocation5 + $0x30] sm:$0xff]
        %v1110 = vld [vmem:[#allocation5 + $0x38] sm:$0xff]
        %v1111 = vld [vmem:[#allocation5 + $0x40] sm:$0xff]
        %v1112 = vld [vmem:[#allocation5 + $0x48] sm:$0xff]
        %v1113 = vld [vmem:[#allocation5 + $0x50] sm:$0xff]
        %v1114 = vld [vmem:[#allocation5 + $0x58] sm:$0xff]
        %v1115 = vld [vmem:[#allocation5 + $0x60] sm:$0xff]
        %v1116 = vld [vmem:[#allocation5 + $0x68] sm:$0xff]
        %v1117 = vld [vmem:[#allocation5 + $0x70] sm:$0xff]
        %v1118 = vld [vmem:[#allocation5 + $0x78] sm:$0xff]
        %v1119 = vld [vmem:[#allocation5 + $0x80] sm:$0xff]
        %v1120 = vld [vmem:[#allocation5 + $0x88] sm:$0xff]
        %v1121 = vld [vmem:[#allocation5 + $0x90] sm:$0xff]
        %v1122 = vld [vmem:[#allocation5 + $0x98] sm:$0xff]
        %v1123 = vld [vmem:[#allocation5 + $0xa0] sm:$0xff]
        %v1124 = vld [vmem:[#allocation5 + $0xa8] sm:$0xff]
        %v1125 = vld [vmem:[#allocation5 + $0xb0] sm:$0xff]
        %v1126 = vld [vmem:[#allocation5 + $0xb8] sm:$0xff]
        %v1127 = vld [vmem:[#allocation5 + $0xc0] sm:$0xff]
        %v1128 = vld [vmem:[#allocation5 + $0xc8] sm:$0xff]
        %v1129 = vld [vmem:[#allocation5 + $0xd0] sm:$0xff]
        %v1130 = vld [vmem:[#allocation5 + $0xd8] sm:$0xff]
        %v1131 = vld [vmem:[#allocation5 + $0xe0] sm:$0xff]
        %v1132 = vld [vmem:[#allocation5 + $0xe8] sm:$0xff]
        %v1133 = vld [vmem:[#allocation5 + $0xf0] sm:$0xff]
        %v1134 = vld [vmem:[#allocation5 + $0xf8] sm:$0xff]
        %v1135 = vld [vmem:[#allocation5 + $0x100] sm:$0xff]
        %v1136 = vld [vmem:[#allocation5 + $0x108] sm:$0xff]
        %v1137 = vld [vmem:[#allocation5 + $0x110] sm:$0xff]
        %v1138 = vld [vmem:[#allocation5 + $0x118] sm:$0xff]
        %v1139 = vld [vmem:[#allocation5 + $0x120] sm:$0xff]
        %v1140 = vld [vmem:[#allocation5 + $0x128] sm:$0xff]
        %v1141 = vld [vmem:[#allocation5 + $0x130] sm:$0xff]
        %v1142 = vld [vmem:[#allocation5 + $0x138] sm:$0xff]
        %v1143 = vld [vmem:[#allocation5 + $0x140] sm:$0xff]
        %v1144 = vld [vmem:[#allocation5 + $0x148] sm:$0xff]
        %v1145 = vld [vmem:[#allocation5 + $0x150] sm:$0xff]
        %v1146 = vld [vmem:[#allocation5 + $0x158] sm:$0xff]
        %v1147 = vld [vmem:[#allocation5 + $0x160] sm:$0xff]
        %v1148 = vld [vmem:[#allocation5 + $0x168] sm:$0xff]
        %v1149 = vld [vmem:[#allocation5 + $0x170] sm:$0xff]
        %v1150 = vld [vmem:[#allocation5 + $0x178] sm:$0xff]
        %v1151 = vld [vmem:[#allocation5 + $0x180] sm:$0xff]
        %v1152 = vld [vmem:[#allocation5 + $0x188] sm:$0xff]
        %v1153 = vld [vmem:[#allocation5 + $0x190] sm:$0xff]
        %v1154 = vld [vmem:[#allocation5 + $0x198] sm:$0xff]
        %v1155 = vld [vmem:[#allocation5 + $0x1a0] sm:$0xff]
        %v1156 = vld [vmem:[#allocation5 + $0x1a8] sm:$0xff]
        %v1157 = vld [vmem:[#allocation5 + $0x1b0] sm:$0xff]
        %v1158 = vld [vmem:[#allocation5 + $0x1b8] sm:$0xff]
        %v1159 = vld [vmem:[#allocation5 + $0x1c0] sm:$0xff]
        %v1160 = vld [vmem:[#allocation5 + $0x1c8] sm:$0xff]
        %v1161 = vld [vmem:[#allocation5 + $0x1d0] sm:$0xff]
        %v1162 = vld [vmem:[#allocation5 + $0x1d8] sm:$0xff]
        %v1163 = vld [vmem:[#allocation5 + $0x1e0] sm:$0xff]
        %v1164 = vld [vmem:[#allocation5 + $0x1e8] sm:$0xff]
        %v1165 = vld [vmem:[#allocation5 + $0x1f0] sm:$0xff]
        %v1166 = vld [vmem:[#allocation5 + $0x1f8] sm:$0xff]
        %v1167 = vld [vmem:[#allocation5 + $0x200] sm:$0xff]
        %v1168 = vld [vmem:[#allocation5 + $0x208] sm:$0xff]
        %v1169 = vld [vmem:[#allocation5 + $0x210] sm:$0xff]
        %v1170 = vld [vmem:[#allocation5 + $0x218] sm:$0xff]
        %v1171 = vld [vmem:[#allocation5 + $0x220] sm:$0xff]
        %v1172 = vld [vmem:[#allocation5 + $0x228] sm:$0xff]
        %v1173 = vld [vmem:[#allocation5 + $0x230] sm:$0xff]
        %v1174 = vld [vmem:[#allocation5 + $0x238] sm:$0xff]
        %v1175 = vld [vmem:[#allocation5 + $0x240] sm:$0xff]
        %v1176 = vld [vmem:[#allocation5 + $0x248] sm:$0xff]
        %v1177 = vld [vmem:[#allocation5 + $0x250] sm:$0xff]
        %v1178 = vld [vmem:[#allocation5 + $0x258] sm:$0xff]
        %v1179 = vld [vmem:[#allocation5 + $0x260] sm:$0xff]
        %v1180 = vld [vmem:[#allocation5 + $0x268] sm:$0xff]
        %v1181 = vld [vmem:[#allocation5 + $0x270] sm:$0xff]
        %v1182 = vld [vmem:[#allocation5 + $0x278] sm:$0xff]
        %v1183 = vld [vmem:[#allocation5 + $0x280] sm:$0xff]
        %v1184 = vld [vmem:[#allocation5 + $0x288] sm:$0xff]
        %v1185 = vld [vmem:[#allocation5 + $0x290] sm:$0xff]
        %v1186 = vld [vmem:[#allocation5 + $0x298] sm:$0xff]
        %v1187 = vld [vmem:[#allocation5 + $0x2a0] sm:$0xff]
        %v1188 = vld [vmem:[#allocation5 + $0x2a8] sm:$0xff]
        %v1189 = vld [vmem:[#allocation5 + $0x2b0] sm:$0xff]
        %v1190 = vld [vmem:[#allocation5 + $0x2b8] sm:$0xff]
        %v1191 = vld [vmem:[#allocation5 + $0x2c0] sm:$0xff]
        %v1192 = vld [vmem:[#allocation5 + $0x2c8] sm:$0xff]
        %v1193 = vld [vmem:[#allocation5 + $0x2d0] sm:$0xff]
        %v1194 = vld [vmem:[#allocation5 + $0x2d8] sm:$0xff]
        %v1195 = vld [vmem:[#allocation5 + $0x2e0] sm:$0xff]
        %v1196 = vld [vmem:[#allocation5 + $0x2e8] sm:$0xff]
        %v1197 = vld [vmem:[#allocation5 + $0x2f0] sm:$0xff]
        %v1198 = vld [vmem:[#allocation5 + $0x2f8] sm:$0xff]
        %v1199 = vld [vmem:[#allocation5 + $0x300] sm:$0xff]
        %v1200 = vld [vmem:[#allocation5 + $0x308] sm:$0xff]
        %v1201 = vld [vmem:[#allocation5 + $0x310] sm:$0xff]
        %v1202 = vld [vmem:[#allocation5 + $0x318] sm:$0xff]
        %v1203 = vld [vmem:[#allocation5 + $0x320] sm:$0xff]
        %v1204 = vld [vmem:[#allocation5 + $0x328] sm:$0xff]
        %v1205 = vld [vmem:[#allocation5 + $0x330] sm:$0xff]
        %v1206 = vld [vmem:[#allocation5 + $0x338] sm:$0xff]
        %v1207 = vld [vmem:[#allocation5 + $0x340] sm:$0xff]
        %v1208 = vld [vmem:[#allocation5 + $0x348] sm:$0xff]
        %v1209 = vld [vmem:[#allocation5 + $0x350] sm:$0xff]
        %v1210 = vld [vmem:[#allocation5 + $0x358] sm:$0xff]
        %v1211 = vld [vmem:[#allocation5 + $0x360] sm:$0xff]
        %v1212 = vld [vmem:[#allocation5 + $0x368] sm:$0xff]
        %v1213 = vld [vmem:[#allocation5 + $0x370] sm:$0xff]
        %v1214 = vld [vmem:[#allocation5 + $0x378] sm:$0xff]
        %v1215 = vld [vmem:[#allocation5 + $0x380] sm:$0xff]
        %v1216 = vld [vmem:[#allocation5 + $0x388] sm:$0xff]
        %v1217 = vld [vmem:[#allocation5 + $0x390] sm:$0xff]
        %v1218 = vld [vmem:[#allocation5 + $0x398] sm:$0xff]
        %v1219 = vld [vmem:[#allocation5 + $0x3a0] sm:$0xff]
        %v1220 = vld [vmem:[#allocation5 + $0x3a8] sm:$0xff]
        %v1221 = vld [vmem:[#allocation5 + $0x3b0] sm:$0xff]
        %v1222 = vld [vmem:[#allocation5 + $0x3b8] sm:$0xff]
        %v1223 = vld [vmem:[#allocation5 + $0x3c0] sm:$0xff]
        %v1224 = vld [vmem:[#allocation5 + $0x3c8] sm:$0xff]
        %v1225 = vld [vmem:[#allocation5 + $0x3d0] sm:$0xff]
        %v1226 = vld [vmem:[#allocation5 + $0x3d8] sm:$0xff]
        %v1227 = vld [vmem:[#allocation5 + $0x3e0] sm:$0xff]
        %v1228 = vld [vmem:[#allocation5 + $0x3e8] sm:$0xff]
        %v1229 = vld [vmem:[#allocation5 + $0x3f0] sm:$0xff]
        %v1230 = vld [vmem:[#allocation5 + $0x3f8] sm:$0xff]
        %v1232 = vperm.slane %v312, 0
        %v1233 = vperm.slane %v312, 1
        %v1234 = vperm.slane %v312, 2
        %v1235 = vperm.slane %v312, 3
        %v1368 = vunpack.c.l.b16 %v1103
        %v1369 = vunpack.c.h.b16 %v1103
        %v1370 = vunpack.c.l.b16 %v1104
        %v1371 = vunpack.c.h.b16 %v1104
        %v1372 = vunpack.c.l.b16 %v1105
        %v1373 = vunpack.c.h.b16 %v1105
        %v1374 = vunpack.c.l.b16 %v1106
        %v1375 = vunpack.c.h.b16 %v1106
        %v1376 = vunpack.c.l.b16 %v1107
        %v1377 = vunpack.c.h.b16 %v1107
        %v1378 = vunpack.c.l.b16 %v1108
        %v1379 = vunpack.c.h.b16 %v1108
        %v1380 = vunpack.c.l.b16 %v1109
        %v1381 = vunpack.c.h.b16 %v1109
        %v1382 = vunpack.c.l.b16 %v1110
        %v1383 = vunpack.c.h.b16 %v1110
        %v1384 = vunpack.c.l.b16 %v1111
        %v1385 = vunpack.c.h.b16 %v1111
        %v1386 = vunpack.c.l.b16 %v1112
        %v1387 = vunpack.c.h.b16 %v1112
        %v1388 = vunpack.c.l.b16 %v1113
        %v1389 = vunpack.c.h.b16 %v1113
        %v1390 = vunpack.c.l.b16 %v1114
        %v1391 = vunpack.c.h.b16 %v1114
        %v1392 = vunpack.c.l.b16 %v1115
        %v1393 = vunpack.c.h.b16 %v1115
        %v1394 = vunpack.c.l.b16 %v1116
        %v1395 = vunpack.c.h.b16 %v1116
        %v1396 = vunpack.c.l.b16 %v1117
        %v1397 = vunpack.c.h.b16 %v1117
        %v1398 = vunpack.c.l.b16 %v1118
        %v1399 = vunpack.c.h.b16 %v1118
        %v1400 = vunpack.c.l.b16 %v1119
        %v1401 = vunpack.c.h.b16 %v1119
        %v1402 = vunpack.c.l.b16 %v1120
        %v1403 = vunpack.c.h.b16 %v1120
        %v1404 = vunpack.c.l.b16 %v1121
        %v1405 = vunpack.c.h.b16 %v1121
        %v1406 = vunpack.c.l.b16 %v1122
        %v1407 = vunpack.c.h.b16 %v1122
        %v1408 = vunpack.c.l.b16 %v1123
        %v1409 = vunpack.c.h.b16 %v1123
        %v1410 = vunpack.c.l.b16 %v1124
        %v1411 = vunpack.c.h.b16 %v1124
        %v1412 = vunpack.c.l.b16 %v1125
        %v1413 = vunpack.c.h.b16 %v1125
        %v1414 = vunpack.c.l.b16 %v1126
        %v1415 = vunpack.c.h.b16 %v1126
        %v1416 = vunpack.c.l.b16 %v1127
        %v1417 = vunpack.c.h.b16 %v1127
        %v1418 = vunpack.c.l.b16 %v1128
        %v1419 = vunpack.c.h.b16 %v1128
        %v1420 = vunpack.c.l.b16 %v1129
        %v1421 = vunpack.c.h.b16 %v1129
        %v1422 = vunpack.c.l.b16 %v1130
        %v1423 = vunpack.c.h.b16 %v1130
        %v1424 = vunpack.c.l.b16 %v1131
        %v1425 = vunpack.c.h.b16 %v1131
        %v1426 = vunpack.c.l.b16 %v1132
        %v1427 = vunpack.c.h.b16 %v1132
        %v1428 = vunpack.c.l.b16 %v1133
        %v1429 = vunpack.c.h.b16 %v1133
        %v1430 = vunpack.c.l.b16 %v1134
        %v1431 = vunpack.c.h.b16 %v1134
        %v1432 = vunpack.c.l.b16 %v1135
        %v1433 = vunpack.c.h.b16 %v1135
        %v1434 = vunpack.c.l.b16 %v1136
        %v1435 = vunpack.c.h.b16 %v1136
        %v1436 = vunpack.c.l.b16 %v1137
        %v1437 = vunpack.c.h.b16 %v1137
        %v1438 = vunpack.c.l.b16 %v1138
        %v1439 = vunpack.c.h.b16 %v1138
        %v1440 = vunpack.c.l.b16 %v1139
        %v1441 = vunpack.c.h.b16 %v1139
        %v1442 = vunpack.c.l.b16 %v1140
        %v1443 = vunpack.c.h.b16 %v1140
        %v1444 = vunpack.c.l.b16 %v1141
        %v1445 = vunpack.c.h.b16 %v1141
        %v1446 = vunpack.c.l.b16 %v1142
        %v1447 = vunpack.c.h.b16 %v1142
        %v1448 = vunpack.c.l.b16 %v1143
        %v1449 = vunpack.c.h.b16 %v1143
        %v1450 = vunpack.c.l.b16 %v1144
        %v1451 = vunpack.c.h.b16 %v1144
        %v1452 = vunpack.c.l.b16 %v1145
        %v1453 = vunpack.c.h.b16 %v1145
        %v1454 = vunpack.c.l.b16 %v1146
        %v1455 = vunpack.c.h.b16 %v1146
        %v1456 = vunpack.c.l.b16 %v1147
        %v1457 = vunpack.c.h.b16 %v1147
        %v1458 = vunpack.c.l.b16 %v1148
        %v1459 = vunpack.c.h.b16 %v1148
        %v1460 = vunpack.c.l.b16 %v1149
        %v1461 = vunpack.c.h.b16 %v1149
        %v1462 = vunpack.c.l.b16 %v1150
        %v1463 = vunpack.c.h.b16 %v1150
        %v1464 = vunpack.c.l.b16 %v1151
        %v1465 = vunpack.c.h.b16 %v1151
        %v1466 = vunpack.c.l.b16 %v1152
        %v1467 = vunpack.c.h.b16 %v1152
        %v1468 = vunpack.c.l.b16 %v1153
        %v1469 = vunpack.c.h.b16 %v1153
        %v1470 = vunpack.c.l.b16 %v1154
        %v1471 = vunpack.c.h.b16 %v1154
        %v1472 = vunpack.c.l.b16 %v1155
        %v1473 = vunpack.c.h.b16 %v1155
        %v1474 = vunpack.c.l.b16 %v1156
        %v1475 = vunpack.c.h.b16 %v1156
        %v1476 = vunpack.c.l.b16 %v1157
        %v1477 = vunpack.c.h.b16 %v1157
        %v1478 = vunpack.c.l.b16 %v1158
        %v1479 = vunpack.c.h.b16 %v1158
        %v1480 = vunpack.c.l.b16 %v1159
        %v1481 = vunpack.c.h.b16 %v1159
        %v1482 = vunpack.c.l.b16 %v1160
        %v1483 = vunpack.c.h.b16 %v1160
        %v1484 = vunpack.c.l.b16 %v1161
        %v1485 = vunpack.c.h.b16 %v1161
        %v1486 = vunpack.c.l.b16 %v1162
        %v1487 = vunpack.c.h.b16 %v1162
        %v1488 = vunpack.c.l.b16 %v1163
        %v1489 = vunpack.c.h.b16 %v1163
        %v1490 = vunpack.c.l.b16 %v1164
        %v1491 = vunpack.c.h.b16 %v1164
        %v1492 = vunpack.c.l.b16 %v1165
        %v1493 = vunpack.c.h.b16 %v1165
        %v1494 = vunpack.c.l.b16 %v1166
        %v1495 = vunpack.c.h.b16 %v1166
        %v1496 = vunpack.c.l.b16 %v1167
        %v1497 = vunpack.c.h.b16 %v1167
        %v1498 = vunpack.c.l.b16 %v1168
        %v1499 = vunpack.c.h.b16 %v1168
        %v1500 = vunpack.c.l.b16 %v1169
        %v1501 = vunpack.c.h.b16 %v1169
        %v1502 = vunpack.c.l.b16 %v1170
        %v1503 = vunpack.c.h.b16 %v1170
        %v1504 = vunpack.c.l.b16 %v1171
        %v1505 = vunpack.c.h.b16 %v1171
        %v1506 = vunpack.c.l.b16 %v1172
        %v1507 = vunpack.c.h.b16 %v1172
        %v1508 = vunpack.c.l.b16 %v1173
        %v1509 = vunpack.c.h.b16 %v1173
        %v1510 = vunpack.c.l.b16 %v1174
        %v1511 = vunpack.c.h.b16 %v1174
        %v1512 = vunpack.c.l.b16 %v1175
        %v1513 = vunpack.c.h.b16 %v1175
        %v1514 = vunpack.c.l.b16 %v1176
        %v1515 = vunpack.c.h.b16 %v1176
        %v1516 = vunpack.c.l.b16 %v1177
        %v1517 = vunpack.c.h.b16 %v1177
        %v1518 = vunpack.c.l.b16 %v1178
        %v1519 = vunpack.c.h.b16 %v1178
        %v1520 = vunpack.c.l.b16 %v1179
        %v1521 = vunpack.c.h.b16 %v1179
        %v1522 = vunpack.c.l.b16 %v1180
        %v1523 = vunpack.c.h.b16 %v1180
        %v1524 = vunpack.c.l.b16 %v1181
        %v1525 = vunpack.c.h.b16 %v1181
        %v1526 = vunpack.c.l.b16 %v1182
        %v1527 = vunpack.c.h.b16 %v1182
        %v1528 = vunpack.c.l.b16 %v1183
        %v1529 = vunpack.c.h.b16 %v1183
        %v1530 = vunpack.c.l.b16 %v1184
        %v1531 = vunpack.c.h.b16 %v1184
        %v1532 = vunpack.c.l.b16 %v1185
        %v1533 = vunpack.c.h.b16 %v1185
        %v1534 = vunpack.c.l.b16 %v1186
        %v1535 = vunpack.c.h.b16 %v1186
        %v1536 = vunpack.c.l.b16 %v1187
        %v1537 = vunpack.c.h.b16 %v1187
        %v1538 = vunpack.c.l.b16 %v1188
        %v1539 = vunpack.c.h.b16 %v1188
        %v1540 = vunpack.c.l.b16 %v1189
        %v1541 = vunpack.c.h.b16 %v1189
        %v1542 = vunpack.c.l.b16 %v1190
        %v1543 = vunpack.c.h.b16 %v1190
        %v1544 = vunpack.c.l.b16 %v1191
        %v1545 = vunpack.c.h.b16 %v1191
        %v1546 = vunpack.c.l.b16 %v1192
        %v1547 = vunpack.c.h.b16 %v1192
        %v1548 = vunpack.c.l.b16 %v1193
        %v1549 = vunpack.c.h.b16 %v1193
        %v1550 = vunpack.c.l.b16 %v1194
        %v1551 = vunpack.c.h.b16 %v1194
        %v1552 = vunpack.c.l.b16 %v1195
        %v1553 = vunpack.c.h.b16 %v1195
        %v1554 = vunpack.c.l.b16 %v1196
        %v1555 = vunpack.c.h.b16 %v1196
        %v1556 = vunpack.c.l.b16 %v1197
        %v1557 = vunpack.c.h.b16 %v1197
        %v1558 = vunpack.c.l.b16 %v1198
        %v1559 = vunpack.c.h.b16 %v1198
        %v1560 = vunpack.c.l.b16 %v1199
        %v1561 = vunpack.c.h.b16 %v1199
        %v1562 = vunpack.c.l.b16 %v1200
        %v1563 = vunpack.c.h.b16 %v1200
        %v1564 = vunpack.c.l.b16 %v1201
        %v1565 = vunpack.c.h.b16 %v1201
        %v1566 = vunpack.c.l.b16 %v1202
        %v1567 = vunpack.c.h.b16 %v1202
        %v1568 = vunpack.c.l.b16 %v1203
        %v1569 = vunpack.c.h.b16 %v1203
        %v1570 = vunpack.c.l.b16 %v1204
        %v1571 = vunpack.c.h.b16 %v1204
        %v1572 = vunpack.c.l.b16 %v1205
        %v1573 = vunpack.c.h.b16 %v1205
        %v1574 = vunpack.c.l.b16 %v1206
        %v1575 = vunpack.c.h.b16 %v1206
        %v1576 = vunpack.c.l.b16 %v1207
        %v1577 = vunpack.c.h.b16 %v1207
        %v1578 = vunpack.c.l.b16 %v1208
        %v1579 = vunpack.c.h.b16 %v1208
        %v1580 = vunpack.c.l.b16 %v1209
        %v1581 = vunpack.c.h.b16 %v1209
        %v1582 = vunpack.c.l.b16 %v1210
        %v1583 = vunpack.c.h.b16 %v1210
        %v1584 = vunpack.c.l.b16 %v1211
        %v1585 = vunpack.c.h.b16 %v1211
        %v1586 = vunpack.c.l.b16 %v1212
        %v1587 = vunpack.c.h.b16 %v1212
        %v1588 = vunpack.c.l.b16 %v1213
        %v1589 = vunpack.c.h.b16 %v1213
        %v1590 = vunpack.c.l.b16 %v1214
        %v1591 = vunpack.c.h.b16 %v1214
        %v1592 = vunpack.c.l.b16 %v1215
        %v1593 = vunpack.c.h.b16 %v1215
        %v1594 = vunpack.c.l.b16 %v1216
        %v1595 = vunpack.c.h.b16 %v1216
        %v1596 = vunpack.c.l.b16 %v1217
        %v1597 = vunpack.c.h.b16 %v1217
        %v1598 = vunpack.c.l.b16 %v1218
        %v1599 = vunpack.c.h.b16 %v1218
        %v1600 = vunpack.c.l.b16 %v1219
        %v1601 = vunpack.c.h.b16 %v1219
        %v1602 = vunpack.c.l.b16 %v1220
        %v1603 = vunpack.c.h.b16 %v1220
        %v1604 = vunpack.c.l.b16 %v1221
        %v1605 = vunpack.c.h.b16 %v1221
        %v1606 = vunpack.c.l.b16 %v1222
        %v1607 = vunpack.c.h.b16 %v1222
        %v1608 = vunpack.c.l.b16 %v1223
        %v1609 = vunpack.c.h.b16 %v1223
        %v1610 = vunpack.c.l.b16 %v1224
        %v1611 = vunpack.c.h.b16 %v1224
        %v1612 = vunpack.c.l.b16 %v1225
        %v1613 = vunpack.c.h.b16 %v1225
        %v1614 = vunpack.c.l.b16 %v1226
        %v1615 = vunpack.c.h.b16 %v1226
        %v1616 = vunpack.c.l.b16 %v1227
        %v1617 = vunpack.c.h.b16 %v1227
        %v1618 = vunpack.c.l.b16 %v1228
        %v1619 = vunpack.c.h.b16 %v1228
        %v1620 = vunpack.c.l.b16 %v1229
        %v1621 = vunpack.c.h.b16 %v1229
        %v1622 = vunpack.c.l.b16 %v1230
        %v1623 = vunpack.c.h.b16 %v1230
        %v1624 = vpack.c.b16 %v1372, %v1368
        %v1625 = vpack.c.b16 %v1373, %v1369
        %v1626 = vpack.c.b16 %v1374, %v1370
        %v1627 = vpack.c.b16 %v1375, %v1371
        %v1628 = vpack.c.b16 %v1380, %v1376
        %v1629 = vpack.c.b16 %v1381, %v1377
        %v1630 = vpack.c.b16 %v1382, %v1378
        %v1631 = vpack.c.b16 %v1383, %v1379
        %v1632 = vpack.c.b16 %v1388, %v1384
        %v1633 = vpack.c.b16 %v1389, %v1385
        %v1634 = vpack.c.b16 %v1390, %v1386
        %v1635 = vpack.c.b16 %v1391, %v1387
        %v1636 = vpack.c.b16 %v1396, %v1392
        %v1637 = vpack.c.b16 %v1397, %v1393
        %v1638 = vpack.c.b16 %v1398, %v1394
        %v1639 = vpack.c.b16 %v1399, %v1395
        %v1640 = vpack.c.b16 %v1404, %v1400
        %v1641 = vpack.c.b16 %v1405, %v1401
        %v1642 = vpack.c.b16 %v1406, %v1402
        %v1643 = vpack.c.b16 %v1407, %v1403
        %v1644 = vpack.c.b16 %v1412, %v1408
        %v1645 = vpack.c.b16 %v1413, %v1409
        %v1646 = vpack.c.b16 %v1414, %v1410
        %v1647 = vpack.c.b16 %v1415, %v1411
        %v1648 = vpack.c.b16 %v1420, %v1416
        %v1649 = vpack.c.b16 %v1421, %v1417
        %v1650 = vpack.c.b16 %v1422, %v1418
        %v1651 = vpack.c.b16 %v1423, %v1419
        %v1652 = vpack.c.b16 %v1428, %v1424
        %v1653 = vpack.c.b16 %v1429, %v1425
        %v1654 = vpack.c.b16 %v1430, %v1426
        %v1655 = vpack.c.b16 %v1431, %v1427
        %v1656 = vpack.c.b16 %v1436, %v1432
        %v1657 = vpack.c.b16 %v1437, %v1433
        %v1658 = vpack.c.b16 %v1438, %v1434
        %v1659 = vpack.c.b16 %v1439, %v1435
        %v1660 = vpack.c.b16 %v1444, %v1440
        %v1661 = vpack.c.b16 %v1445, %v1441
        %v1662 = vpack.c.b16 %v1446, %v1442
        %v1663 = vpack.c.b16 %v1447, %v1443
        %v1664 = vpack.c.b16 %v1452, %v1448
        %v1665 = vpack.c.b16 %v1453, %v1449
        %v1666 = vpack.c.b16 %v1454, %v1450
        %v1667 = vpack.c.b16 %v1455, %v1451
        %v1668 = vpack.c.b16 %v1460, %v1456
        %v1669 = vpack.c.b16 %v1461, %v1457
        %v1670 = vpack.c.b16 %v1462, %v1458
        %v1671 = vpack.c.b16 %v1463, %v1459
        %v1672 = vpack.c.b16 %v1468, %v1464
        %v1673 = vpack.c.b16 %v1469, %v1465
        %v1674 = vpack.c.b16 %v1470, %v1466
        %v1675 = vpack.c.b16 %v1471, %v1467
        %v1676 = vpack.c.b16 %v1476, %v1472
        %v1677 = vpack.c.b16 %v1477, %v1473
        %v1678 = vpack.c.b16 %v1478, %v1474
        %v1679 = vpack.c.b16 %v1479, %v1475
        %v1680 = vpack.c.b16 %v1484, %v1480
        %v1681 = vpack.c.b16 %v1485, %v1481
        %v1682 = vpack.c.b16 %v1486, %v1482
        %v1683 = vpack.c.b16 %v1487, %v1483
        %v1684 = vpack.c.b16 %v1492, %v1488
        %v1685 = vpack.c.b16 %v1493, %v1489
        %v1686 = vpack.c.b16 %v1494, %v1490
        %v1687 = vpack.c.b16 %v1495, %v1491
        %v1688 = vpack.c.b16 %v1500, %v1496
        %v1689 = vpack.c.b16 %v1501, %v1497
        %v1690 = vpack.c.b16 %v1502, %v1498
        %v1691 = vpack.c.b16 %v1503, %v1499
        %v1692 = vpack.c.b16 %v1508, %v1504
        %v1693 = vpack.c.b16 %v1509, %v1505
        %v1694 = vpack.c.b16 %v1510, %v1506
        %v1695 = vpack.c.b16 %v1511, %v1507
        %v1696 = vpack.c.b16 %v1516, %v1512
        %v1697 = vpack.c.b16 %v1517, %v1513
        %v1698 = vpack.c.b16 %v1518, %v1514
        %v1699 = vpack.c.b16 %v1519, %v1515
        %v1700 = vpack.c.b16 %v1524, %v1520
        %v1701 = vpack.c.b16 %v1525, %v1521
        %v1702 = vpack.c.b16 %v1526, %v1522
        %v1703 = vpack.c.b16 %v1527, %v1523
        %v1704 = vpack.c.b16 %v1532, %v1528
        %v1705 = vpack.c.b16 %v1533, %v1529
        %v1706 = vpack.c.b16 %v1534, %v1530
        %v1707 = vpack.c.b16 %v1535, %v1531
        %v1708 = vpack.c.b16 %v1540, %v1536
        %v1709 = vpack.c.b16 %v1541, %v1537
        %v1710 = vpack.c.b16 %v1542, %v1538
        %v1711 = vpack.c.b16 %v1543, %v1539
        %v1712 = vpack.c.b16 %v1548, %v1544
        %v1713 = vpack.c.b16 %v1549, %v1545
        %v1714 = vpack.c.b16 %v1550, %v1546
        %v1715 = vpack.c.b16 %v1551, %v1547
        %v1716 = vpack.c.b16 %v1556, %v1552
        %v1717 = vpack.c.b16 %v1557, %v1553
        %v1718 = vpack.c.b16 %v1558, %v1554
        %v1719 = vpack.c.b16 %v1559, %v1555
        %v1720 = vpack.c.b16 %v1564, %v1560
        %v1721 = vpack.c.b16 %v1565, %v1561
        %v1722 = vpack.c.b16 %v1566, %v1562
        %v1723 = vpack.c.b16 %v1567, %v1563
        %v1724 = vpack.c.b16 %v1572, %v1568
        %v1725 = vpack.c.b16 %v1573, %v1569
        %v1726 = vpack.c.b16 %v1574, %v1570
        %v1727 = vpack.c.b16 %v1575, %v1571
        %v1728 = vpack.c.b16 %v1580, %v1576
        %v1729 = vpack.c.b16 %v1581, %v1577
        %v1730 = vpack.c.b16 %v1582, %v1578
        %v1731 = vpack.c.b16 %v1583, %v1579
        %v1732 = vpack.c.b16 %v1588, %v1584
        %v1733 = vpack.c.b16 %v1589, %v1585
        %v1734 = vpack.c.b16 %v1590, %v1586
        %v1735 = vpack.c.b16 %v1591, %v1587
        %v1736 = vpack.c.b16 %v1596, %v1592
        %v1737 = vpack.c.b16 %v1597, %v1593
        %v1738 = vpack.c.b16 %v1598, %v1594
        %v1739 = vpack.c.b16 %v1599, %v1595
        %v1740 = vpack.c.b16 %v1604, %v1600
        %v1741 = vpack.c.b16 %v1605, %v1601
        %v1742 = vpack.c.b16 %v1606, %v1602
        %v1743 = vpack.c.b16 %v1607, %v1603
        %v1744 = vpack.c.b16 %v1612, %v1608
        %v1745 = vpack.c.b16 %v1613, %v1609
        %v1746 = vpack.c.b16 %v1614, %v1610
        %v1747 = vpack.c.b16 %v1615, %v1611
        %v1748 = vpack.c.b16 %v1620, %v1616
        %v1749 = vpack.c.b16 %v1621, %v1617
        %v1750 = vpack.c.b16 %v1622, %v1618
        %v1751 = vpack.c.b16 %v1623, %v1619
        %1880 = vmatpush.bf16.msra.mxu0 %v1652
        %1881 = vmatpush.bf16.msra.mxu0 %v1648
        %1882 = vmatpush.bf16.msra.mxu0 %v1644
        %1883 = vmatpush.bf16.msra.mxu0 %v1640
        %1884 = vmatpush.bf16.msra.mxu0 %v1636
        %1885 = vmatpush.bf16.msra.mxu0 %v1632
        %1886 = vmatpush.bf16.msra.mxu0 %v1628
        %1887 = vmatpush.bf16.msra.mxu0 %v1624
        %1888 = vmatmul.bf16.gmra.mxu0 %v1095
        %v1889 = vpop.f32.mrf.mxu0
        %v1890 = vadd.f32 %v1232, %v1889
        %v1891 = vpop.f32.mrf.mxu0
        %v1892 = vadd.f32 %v1232, %v1891
        %1893 = vmatmul.bf16.gmra.mxu0 %v1099
        %v1894 = vpop.f32.mrf.mxu0
        %v1895 = vadd.f32 %v1232, %v1894
        %v1896 = vpop.f32.mrf.mxu0
        %v1897 = vadd.f32 %v1232, %v1896
        %1898 = vdwg.mxu0
        %1899 = vmatpush.bf16.msra.mxu0 %v1684
        %1900 = vmatpush.bf16.msra.mxu0 %v1680
        %1901 = vmatpush.bf16.msra.mxu0 %v1676
        %1902 = vmatpush.bf16.msra.mxu0 %v1672
        %1903 = vmatpush.bf16.msra.mxu0 %v1668
        %1904 = vmatpush.bf16.msra.mxu0 %v1664
        %1905 = vmatpush.bf16.msra.mxu0 %v1660
        %1906 = vmatpush.bf16.msra.mxu0 %v1656
        %1907 = vmatmul.bf16.gmra.mxu0 %v1096
        %v1908 = vpop.f32.mrf.mxu0
        %v1909 = vadd.f32 %v1890, %v1908
        %v1910 = vpop.f32.mrf.mxu0
        %v1911 = vadd.f32 %v1892, %v1910
        %1912 = vmatmul.bf16.gmra.mxu0 %v1100
        %v1913 = vpop.f32.mrf.mxu0
        %v1914 = vadd.f32 %v1895, %v1913
        %v1915 = vpop.f32.mrf.mxu0
        %v1916 = vadd.f32 %v1897, %v1915
        %1917 = vdwg.mxu0
        %1918 = vmatpush.bf16.msra.mxu0 %v1716
        %1919 = vmatpush.bf16.msra.mxu0 %v1712
        %1920 = vmatpush.bf16.msra.mxu0 %v1708
        %1921 = vmatpush.bf16.msra.mxu0 %v1704
        %1922 = vmatpush.bf16.msra.mxu0 %v1700
        %1923 = vmatpush.bf16.msra.mxu0 %v1696
        %1924 = vmatpush.bf16.msra.mxu0 %v1692
        %1925 = vmatpush.bf16.msra.mxu0 %v1688
        %1926 = vmatmul.bf16.gmra.mxu0 %v1097
        %v1927 = vpop.f32.mrf.mxu0
        %v1928 = vadd.f32 %v1909, %v1927
        %v1929 = vpop.f32.mrf.mxu0
        %v1930 = vadd.f32 %v1911, %v1929
        %1931 = vmatmul.bf16.gmra.mxu0 %v1101
        %v1932 = vpop.f32.mrf.mxu0
        %v1933 = vadd.f32 %v1914, %v1932
        %v1934 = vpop.f32.mrf.mxu0
        %v1935 = vadd.f32 %v1916, %v1934
        %1936 = vdwg.mxu0
        %1937 = vmatpush.bf16.msra.mxu0 %v1748
        %1938 = vmatpush.bf16.msra.mxu0 %v1744
        %1939 = vmatpush.bf16.msra.mxu0 %v1740
        %1940 = vmatpush.bf16.msra.mxu0 %v1736
        %1941 = vmatpush.bf16.msra.mxu0 %v1732
        %1942 = vmatpush.bf16.msra.mxu0 %v1728
        %1943 = vmatpush.bf16.msra.mxu0 %v1724
        %1944 = vmatpush.bf16.msra.mxu0 %v1720
        %1945 = vmatmul.bf16.gmra.mxu0 %v1098
        %v1946 = vpop.f32.mrf.mxu0
        %v1947 = vadd.f32 %v1928, %v1946
        %v1948 = vpop.f32.mrf.mxu0
        %v1949 = vadd.f32 %v1930, %v1948
        %1950 = vmatmul.bf16.gmra.mxu0 %v1102
        %v1951 = vpop.f32.mrf.mxu0
        %v1952 = vadd.f32 %v1933, %v1951
        %v1953 = vpop.f32.mrf.mxu0
        %v1954 = vadd.f32 %v1935, %v1953
        %1955 = vdwg.mxu0
        %1956 = vmatpush.bf16.msra.mxu0 %v1653
        %1957 = vmatpush.bf16.msra.mxu0 %v1649
        %1958 = vmatpush.bf16.msra.mxu0 %v1645
        %1959 = vmatpush.bf16.msra.mxu0 %v1641
        %1960 = vmatpush.bf16.msra.mxu0 %v1637
        %1961 = vmatpush.bf16.msra.mxu0 %v1633
        %1962 = vmatpush.bf16.msra.mxu0 %v1629
        %1963 = vmatpush.bf16.msra.mxu0 %v1625
        %1964 = vmatmul.bf16.gmra.mxu0 %v1095
        %v1965 = vpop.f32.mrf.mxu0
        %v1966 = vadd.f32 %v1233, %v1965
        %v1967 = vpop.f32.mrf.mxu0
        %v1968 = vadd.f32 %v1233, %v1967
        %1969 = vmatmul.bf16.gmra.mxu0 %v1099
        %v1970 = vpop.f32.mrf.mxu0
        %v1971 = vadd.f32 %v1233, %v1970
        %v1972 = vpop.f32.mrf.mxu0
        %v1973 = vadd.f32 %v1233, %v1972
        %1974 = vdwg.mxu0
        %1975 = vmatpush.bf16.msra.mxu0 %v1685
        %1976 = vmatpush.bf16.msra.mxu0 %v1681
        %1977 = vmatpush.bf16.msra.mxu0 %v1677
        %1978 = vmatpush.bf16.msra.mxu0 %v1673
        %1979 = vmatpush.bf16.msra.mxu0 %v1669
        %1980 = vmatpush.bf16.msra.mxu0 %v1665
        %1981 = vmatpush.bf16.msra.mxu0 %v1661
        %1982 = vmatpush.bf16.msra.mxu0 %v1657
        %1983 = vmatmul.bf16.gmra.mxu0 %v1096
        %v1984 = vpop.f32.mrf.mxu0
        %v1985 = vadd.f32 %v1966, %v1984
        %v1986 = vpop.f32.mrf.mxu0
        %v1987 = vadd.f32 %v1968, %v1986
        %1988 = vmatmul.bf16.gmra.mxu0 %v1100
        %v1989 = vpop.f32.mrf.mxu0
        %v1990 = vadd.f32 %v1971, %v1989
        %v1991 = vpop.f32.mrf.mxu0
        %v1992 = vadd.f32 %v1973, %v1991
        %1993 = vdwg.mxu0
        %1994 = vmatpush.bf16.msra.mxu0 %v1717
        %1995 = vmatpush.bf16.msra.mxu0 %v1713
        %1996 = vmatpush.bf16.msra.mxu0 %v1709
        %1997 = vmatpush.bf16.msra.mxu0 %v1705
        %1998 = vmatpush.bf16.msra.mxu0 %v1701
        %1999 = vmatpush.bf16.msra.mxu0 %v1697
        %2000 = vmatpush.bf16.msra.mxu0 %v1693
        %2001 = vmatpush.bf16.msra.mxu0 %v1689
        %2002 = vmatmul.bf16.gmra.mxu0 %v1097
        %v2003 = vpop.f32.mrf.mxu0
        %v2004 = vadd.f32 %v1985, %v2003
        %v2005 = vpop.f32.mrf.mxu0
        %v2006 = vadd.f32 %v1987, %v2005
        %2007 = vmatmul.bf16.gmra.mxu0 %v1101
        %v2008 = vpop.f32.mrf.mxu0
        %v2009 = vadd.f32 %v1990, %v2008
        %v2010 = vpop.f32.mrf.mxu0
        %v2011 = vadd.f32 %v1992, %v2010
        %2012 = vdwg.mxu0
        %2013 = vmatpush.bf16.msra.mxu0 %v1749
        %2014 = vmatpush.bf16.msra.mxu0 %v1745
        %2015 = vmatpush.bf16.msra.mxu0 %v1741
        %2016 = vmatpush.bf16.msra.mxu0 %v1737
        %2017 = vmatpush.bf16.msra.mxu0 %v1733
        %2018 = vmatpush.bf16.msra.mxu0 %v1729
        %2019 = vmatpush.bf16.msra.mxu0 %v1725
        %2020 = vmatpush.bf16.msra.mxu0 %v1721
        %2021 = vmatmul.bf16.gmra.mxu0 %v1098
        %v2022 = vpop.f32.mrf.mxu0
        %v2023 = vadd.f32 %v2004, %v2022
        %v2024 = vpop.f32.mrf.mxu0
        %v2025 = vadd.f32 %v2006, %v2024
        %2026 = vmatmul.bf16.gmra.mxu0 %v1102
        %v2027 = vpop.f32.mrf.mxu0
        %v2028 = vadd.f32 %v2009, %v2027
        %v2029 = vpop.f32.mrf.mxu0
        %v2030 = vadd.f32 %v2011, %v2029
        %2031 = vdwg.mxu0
        %2032 = vmatpush.bf16.msra.mxu0 %v1654
        %2033 = vmatpush.bf16.msra.mxu0 %v1650
        %2034 = vmatpush.bf16.msra.mxu0 %v1646
        %2035 = vmatpush.bf16.msra.mxu0 %v1642
        %2036 = vmatpush.bf16.msra.mxu0 %v1638
        %2037 = vmatpush.bf16.msra.mxu0 %v1634
        %2038 = vmatpush.bf16.msra.mxu0 %v1630
        %2039 = vmatpush.bf16.msra.mxu0 %v1626
        %2040 = vmatmul.bf16.gmra.mxu0 %v1095
        %v2041 = vpop.f32.mrf.mxu0
        %v2042 = vadd.f32 %v1234, %v2041
        %v2043 = vpop.f32.mrf.mxu0
        %v2044 = vadd.f32 %v1234, %v2043
        %2045 = vmatmul.bf16.gmra.mxu0 %v1099
        %v2046 = vpop.f32.mrf.mxu0
        %v2047 = vadd.f32 %v1234, %v2046
        %v2048 = vpop.f32.mrf.mxu0
        %v2049 = vadd.f32 %v1234, %v2048
        %2050 = vdwg.mxu0
        %2051 = vmatpush.bf16.msra.mxu0 %v1686
        %2052 = vmatpush.bf16.msra.mxu0 %v1682
        %2053 = vmatpush.bf16.msra.mxu0 %v1678
        %2054 = vmatpush.bf16.msra.mxu0 %v1674
        %2055 = vmatpush.bf16.msra.mxu0 %v1670
        %2056 = vmatpush.bf16.msra.mxu0 %v1666
        %2057 = vmatpush.bf16.msra.mxu0 %v1662
        %2058 = vmatpush.bf16.msra.mxu0 %v1658
        %2059 = vmatmul.bf16.gmra.mxu0 %v1096
        %v2060 = vpop.f32.mrf.mxu0
        %v2061 = vadd.f32 %v2042, %v2060
        %v2062 = vpop.f32.mrf.mxu0
        %v2063 = vadd.f32 %v2044, %v2062
        %2064 = vmatmul.bf16.gmra.mxu0 %v1100
        %v2065 = vpop.f32.mrf.mxu0
        %v2066 = vadd.f32 %v2047, %v2065
        %v2067 = vpop.f32.mrf.mxu0
        %v2068 = vadd.f32 %v2049, %v2067
        %2069 = vdwg.mxu0
        %2070 = vmatpush.bf16.msra.mxu0 %v1718
        %2071 = vmatpush.bf16.msra.mxu0 %v1714
        %2072 = vmatpush.bf16.msra.mxu0 %v1710
        %2073 = vmatpush.bf16.msra.mxu0 %v1706
        %2074 = vmatpush.bf16.msra.mxu0 %v1702
        %2075 = vmatpush.bf16.msra.mxu0 %v1698
        %2076 = vmatpush.bf16.msra.mxu0 %v1694
        %2077 = vmatpush.bf16.msra.mxu0 %v1690
        %2078 = vmatmul.bf16.gmra.mxu0 %v1097
        %v2079 = vpop.f32.mrf.mxu0
        %v2080 = vadd.f32 %v2061, %v2079
        %v2081 = vpop.f32.mrf.mxu0
        %v2082 = vadd.f32 %v2063, %v2081
        %2083 = vmatmul.bf16.gmra.mxu0 %v1101
        %v2084 = vpop.f32.mrf.mxu0
        %v2085 = vadd.f32 %v2066, %v2084
        %v2086 = vpop.f32.mrf.mxu0
        %v2087 = vadd.f32 %v2068, %v2086
        %2088 = vdwg.mxu0
        %2089 = vmatpush.bf16.msra.mxu0 %v1750
        %2090 = vmatpush.bf16.msra.mxu0 %v1746
        %2091 = vmatpush.bf16.msra.mxu0 %v1742
        %2092 = vmatpush.bf16.msra.mxu0 %v1738
        %2093 = vmatpush.bf16.msra.mxu0 %v1734
        %2094 = vmatpush.bf16.msra.mxu0 %v1730
        %2095 = vmatpush.bf16.msra.mxu0 %v1726
        %2096 = vmatpush.bf16.msra.mxu0 %v1722
        %2097 = vmatmul.bf16.gmra.mxu0 %v1098
        %v2098 = vpop.f32.mrf.mxu0
        %v2099 = vadd.f32 %v2080, %v2098
        %v2100 = vpop.f32.mrf.mxu0
        %v2101 = vadd.f32 %v2082, %v2100
        %2102 = vmatmul.bf16.gmra.mxu0 %v1102
        %v2103 = vpop.f32.mrf.mxu0
        %v2104 = vadd.f32 %v2085, %v2103
        %v2105 = vpop.f32.mrf.mxu0
        %v2106 = vadd.f32 %v2087, %v2105
        %2107 = vdwg.mxu0
        %2108 = vmatpush.bf16.msra.mxu0 %v1655
        %2109 = vmatpush.bf16.msra.mxu0 %v1651
        %2110 = vmatpush.bf16.msra.mxu0 %v1647
        %2111 = vmatpush.bf16.msra.mxu0 %v1643
        %2112 = vmatpush.bf16.msra.mxu0 %v1639
        %2113 = vmatpush.bf16.msra.mxu0 %v1635
        %2114 = vmatpush.bf16.msra.mxu0 %v1631
        %2115 = vmatpush.bf16.msra.mxu0 %v1627
        %2116 = vmatmul.bf16.gmra.mxu0 %v1095
        %v2117 = vpop.f32.mrf.mxu0
        %v2118 = vadd.f32 %v1235, %v2117
        %v2119 = vpop.f32.mrf.mxu0
        %v2120 = vadd.f32 %v1235, %v2119
        %2121 = vmatmul.bf16.gmra.mxu0 %v1099
        %v2122 = vpop.f32.mrf.mxu0
        %v2123 = vadd.f32 %v1235, %v2122
        %v2124 = vpop.f32.mrf.mxu0
        %v2125 = vadd.f32 %v1235, %v2124
        %2126 = vdwg.mxu0
        %2127 = vmatpush.bf16.msra.mxu0 %v1687
        %2128 = vmatpush.bf16.msra.mxu0 %v1683
        %2129 = vmatpush.bf16.msra.mxu0 %v1679
        %2130 = vmatpush.bf16.msra.mxu0 %v1675
        %2131 = vmatpush.bf16.msra.mxu0 %v1671
        %2132 = vmatpush.bf16.msra.mxu0 %v1667
        %2133 = vmatpush.bf16.msra.mxu0 %v1663
        %2134 = vmatpush.bf16.msra.mxu0 %v1659
        %2135 = vmatmul.bf16.gmra.mxu0 %v1096
        %v2136 = vpop.f32.mrf.mxu0
        %v2137 = vadd.f32 %v2118, %v2136
        %v2138 = vpop.f32.mrf.mxu0
        %v2139 = vadd.f32 %v2120, %v2138
        %2140 = vmatmul.bf16.gmra.mxu0 %v1100
        %v2141 = vpop.f32.mrf.mxu0
        %v2142 = vadd.f32 %v2123, %v2141
        %v2143 = vpop.f32.mrf.mxu0
        %v2144 = vadd.f32 %v2125, %v2143
        %2145 = vdwg.mxu0
        %2146 = vmatpush.bf16.msra.mxu0 %v1719
        %2147 = vmatpush.bf16.msra.mxu0 %v1715
        %2148 = vmatpush.bf16.msra.mxu0 %v1711
        %2149 = vmatpush.bf16.msra.mxu0 %v1707
        %2150 = vmatpush.bf16.msra.mxu0 %v1703
        %2151 = vmatpush.bf16.msra.mxu0 %v1699
        %2152 = vmatpush.bf16.msra.mxu0 %v1695
        %2153 = vmatpush.bf16.msra.mxu0 %v1691
        %2154 = vmatmul.bf16.gmra.mxu0 %v1097
        %v2155 = vpop.f32.mrf.mxu0
        %v2156 = vadd.f32 %v2137, %v2155
        %v2157 = vpop.f32.mrf.mxu0
        %v2158 = vadd.f32 %v2139, %v2157
        %2159 = vmatmul.bf16.gmra.mxu0 %v1101
        %v2160 = vpop.f32.mrf.mxu0
        %v2161 = vadd.f32 %v2142, %v2160
        %v2162 = vpop.f32.mrf.mxu0
        %v2163 = vadd.f32 %v2144, %v2162
        %2164 = vdwg.mxu0
        %2165 = vmatpush.bf16.msra.mxu0 %v1751
        %2166 = vmatpush.bf16.msra.mxu0 %v1747
        %2167 = vmatpush.bf16.msra.mxu0 %v1743
        %2168 = vmatpush.bf16.msra.mxu0 %v1739
        %2169 = vmatpush.bf16.msra.mxu0 %v1735
        %2170 = vmatpush.bf16.msra.mxu0 %v1731
        %2171 = vmatpush.bf16.msra.mxu0 %v1727
        %2172 = vmatpush.bf16.msra.mxu0 %v1723
        %2173 = vmatmul.bf16.gmra.mxu0 %v1098
        %v2174 = vpop.f32.mrf.mxu0
        %v2175 = vadd.f32 %v2156, %v2174
        %v2176 = vpop.f32.mrf.mxu0
        %v2177 = vadd.f32 %v2158, %v2176
        %2178 = vmatmul.bf16.gmra.mxu0 %v1102
        %v2179 = vpop.f32.mrf.mxu0
        %v2180 = vadd.f32 %v2161, %v2179
        %v2181 = vpop.f32.mrf.mxu0
        %v2182 = vadd.f32 %v2163, %v2181
        %2183 = vdwg.mxu0
        %v2184 = vadd.f32 %v1947, %v389
        %v2185 = vadd.f32 %v2023, %v408
        %v2186 = vadd.f32 %v2099, %v427
        %v2187 = vadd.f32 %v2175, %v446
        %v2188 = vadd.f32 %v1949, %v391
        %v2189 = vadd.f32 %v2025, %v410
        %v2190 = vadd.f32 %v2101, %v429
        %v2191 = vadd.f32 %v2177, %v448
        %v2192 = vadd.f32 %v1952, %v394
        %v2193 = vadd.f32 %v2028, %v413
        %v2194 = vadd.f32 %v2104, %v432
        %v2195 = vadd.f32 %v2180, %v451
        %v2196 = vadd.f32 %v1954, %v396
        %v2197 = vadd.f32 %v2030, %v415
        %v2198 = vadd.f32 %v2106, %v434
        %v2199 = vadd.f32 %v2182, %v453
        %2200 = vst [vmem:[%s293] sm:$0xff] %v2184
        %2201 = vst [vmem:[%s293 + $0x8] sm:$0xff] %v2185
        %2202 = vst [vmem:[%s293 + $0x10] sm:$0xff] %v2186
        %2203 = vst [vmem:[%s293 + $0x18] sm:$0xff] %v2187
        %2204 = vst [vmem:[%s293 + $0x20] sm:$0xff] %v2188
        %2205 = vst [vmem:[%s293 + $0x28] sm:$0xff] %v2189
        %2206 = vst [vmem:[%s293 + $0x30] sm:$0xff] %v2190
        %2207 = vst [vmem:[%s293 + $0x38] sm:$0xff] %v2191
        %2208 = vst [vmem:[%s293 + $0x40] sm:$0xff] %v2192
        %2209 = vst [vmem:[%s293 + $0x48] sm:$0xff] %v2193
        %2210 = vst [vmem:[%s293 + $0x50] sm:$0xff] %v2194
        %2211 = vst [vmem:[%s293 + $0x58] sm:$0xff] %v2195
        %2212 = vst [vmem:[%s293 + $0x60] sm:$0xff] %v2196
        %2213 = vst [vmem:[%s293 + $0x68] sm:$0xff] %v2197
        %2214 = vst [vmem:[%s293 + $0x70] sm:$0xff] %v2198
        %2215 = vst [vmem:[%s293 + $0x78] sm:$0xff] %v2199
        %s2216 = sand.u32 %s161, 1
        %s2217 = scalar_lea.sflag [#allocation4], %s2216
        %s2218 = sand.u32 %s161, 1
        %s2219 = smul.addr %s2218, 128
        %s2220 = scalar_lea.vmem [#allocation8], %s2219
        // Predicated region
        $region57: #{tpu_custom_call.1} parent=43 // pred_check
          %p2221 = pneg %p171
        $region58: #{tpu_custom_call.1} parent=43 // pred_check_branch
          %2223 = sbr.rel (%p2221) target = $region60
        $region59: #{tpu_custom_call.1} parent=43 // pred_region
          %s2224 = smul.u32 4, %s22
          %2226 = vsyncadd %s2217, 0
          %s2227 = smul.addr %s2224, 4
          %s2228 = smul.addr %s2227, 8
          %s2229 = scalar_lea.hbm %s6, %s2228
          %s2230 = sshll.u32 %s2220, 4
          %s2231 = int_to_ptr.vmem [resolvable:$true] %s2230
          %s2232 = sshll.u32 %s2229, 4
          %s2233 = int_to_ptr.hbm [resolvable:$true] %s2232
          %2238 = dma.vmem_to_hbm [thread:$0]  %s2231, 2048, %s2233, %s2217, 512, 512, 32
        $region60: #{tpu_custom_call.1} parent=43 // pred_fallthru
          _
      $region44: #{tpu_custom_call.1} parent=5 // pred_fallthru
        _
      %p2239 = scmp.le.s32.totalorder 2, %s17
      // Predicated region
      $region61: #{tpu_custom_call.1} parent=5 // pred_check
        %p2240 = pneg %p2239
      $region62: #{tpu_custom_call.1} parent=5 // pred_check_branch
        %2242 = sbr.rel (%p2240) target = $region64
      $region63: #{tpu_custom_call.1} parent=5 // pred_region
        %s2243 = ssub.s32 %s17, 2
        // Predicated region
        $region65: #{tpu_custom_call.1} parent=63 // pred_check
          %p2244 = pneg %p177
        $region66: #{tpu_custom_call.1} parent=63 // pred_check_branch
          %2246 = sbr.rel (%p2244) target = $region68
        $region67: #{tpu_custom_call.1} parent=63 // pred_region
          %s2247 = sand.u32 %s162, 1
          %s2248 = scalar_lea.sflag [#allocation4], %s2247
          %s2249 = sand.u32 %s162, 1
          %s2250 = smul.addr %s2249, 128
          %s2251 = scalar_lea.vmem [#allocation8], %s2250
          %2253 = dma.done %s2248, 2048
        $region68: #{tpu_custom_call.1} parent=63 // pred_fallthru
          _
      $region64: #{tpu_custom_call.1} parent=5 // pred_fallthru
        _
    $region6: #{tpu_custom_call.1} parent=1 // loop_footer
      %s21 = sadd.s32 1, %s17
    $region7: #{tpu_custom_call.1} parent=1 // loop_footer_branch
      %16 = sbr.rel target = $region3
    $region8: #{tpu_custom_call.1} parent=1 // loop_exit
      _
    %2254 = vsyncpa [#allocation3], 1
    %s2255 = scalar_lea.sflag [#allocation3], 1
    %2256 = vsyncpa %s2255, 1
    %2257 = vsyncpa [#allocation6], 1
    %2258 = vsyncpa [#allocation4], 1
    %s2259 = scalar_lea.sflag [#allocation4], 1
    %2260 = vsyncpa %s2259, 1

</llo_original>
